<compile_context>
chip_gen: v7x
topology: tpu7x:2x2x1
jax: 0.10.0
libtpu: 0.0.40
codegen_flags: <defaults>
</compile_context>

<pallas_src>
import jax
import jax.numpy as jnp
from jax.experimental import pallas as pl
from jax.experimental.pallas import tpu as pltpu

LEAKY_SLOPE = 0.01  # PyTorch nn.LeakyReLU() default negative_slope


def _round_up(n, m):
    return ((n + m - 1) // m) * m


def _pad_to(a, shape):
    pads = [(0, t - s) for s, t in zip(a.shape, shape)]
    if all(p == (0, 0) for p in pads):
        return a
    return jnp.pad(a, pads)


def make_discriminator_kernel(num_linear_layers, matmul_dtype):
    """Kernel for an MLP with `num_linear_layers` Linear layers (last followed by
    Sigmoid, the others by LeakyReLU).  Layer 0 is accumulated over a feature (K)
    grid axis into an f32 VMEM scratch; the remaining layers run fused in the
    finalize step."""

    def kernel(x_ref, *refs):
        acc_ref = refs[-1]          # VMEM f32 scratch: (tile_b, h0_pad)
        out_ref = refs[-2]          # (tile_b, final_pad)
        param_refs = refs[:-2]      # w0, b0, w1, b1, ..., wL, bL

        k = pl.program_id(1)

        @pl.when(k == 0)
        def _init():
            acc_ref[...] = jnp.zeros_like(acc_ref)

        # Layer 0: partial product over the feature (K) axis, MXU inputs in
        # matmul_dtype, f32 accumulation.
        x_blk = x_ref[...].astype(matmul_dtype)
        w0_blk = param_refs[0][...].astype(matmul_dtype)
        acc_ref[...] += jnp.dot(x_blk, w0_blk, preferred_element_type=jnp.float32)

        @pl.when(k == pl.num_programs(1) - 1)
        def _finalize():
            h = acc_ref[...] + param_refs[1][...]            # bias 0 (f32)
            if num_linear_layers == 1:
                # Single Linear -> Sigmoid (exp + reciprocal both ride the EUP).
                h = pl.reciprocal(1.0 + jnp.exp(-h), approx=True)
            else:
                h = jnp.where(h >= 0.0, h, LEAKY_SLOPE * h)  # LeakyReLU (f32 VPU)
                for i in range(1, num_linear_layers):
                    w = param_refs[2 * i][...].astype(matmul_dtype)
                    b = param_refs[2 * i + 1][...]           # f32
                    h = jnp.dot(h.astype(matmul_dtype), w,
                                preferred_element_type=jnp.float32) + b
                    if i < num_linear_layers - 1:
                        h = jnp.where(h >= 0.0, h, LEAKY_SLOPE * h)
                    else:
                        h = pl.reciprocal(1.0 + jnp.exp(-h), approx=True)
            out_ref[...] = h.astype(out_ref.dtype)

    return kernel


def discriminator_forward(x, weights, biases, *, tile_b=None,
                          matmul_dtype=jnp.bfloat16,
                          vmem_budget_bytes=32 * 2 ** 20):
    """x: (B, ...) -> flattened to (B, F).  weights[i]: (in_i, out_i) (pre-transposed
    from the PyTorch (out, in) layout), biases[i]: (1, out_i).  Returns (B, 1) f32."""
    B = x.shape[0]
    x2 = x.reshape(B, -1)                         # keep caller dtype; cast in-kernel
    F = x2.shape[1]
    num_layers = len(weights)
    assert num_layers >= 1 and len(biases) == num_layers
    assert weights[0].shape[0] == F

    # ---- lane-pad every layer width to a multiple of 128 (zeros keep math exact) ----
    out_dims = [w.shape[1] for w in weights]              # hidden..., 1
    out_pads = [_round_up(d, 128) for d in out_dims]
    h0_pad = out_pads[0]
    final_pad = out_pads[-1]

    # ---- feature (K) axis blocking for the first matmul ----
    tile_k = _round_up(F, 128) if F <= 2048 else 512
    f_pad = _round_up(F, tile_k)
    nk = f_pad // tile_k

    in_pads = [f_pad] + out_pads[:-1]
    # Pre-cast weights to the matmul dtype (halves their DMA for bf16); biases stay f32.
    wp = [_pad_to(w.astype(matmul_dtype), (ip, op))
          for w, ip, op in zip(weights, in_pads, out_pads)]
    bp = [_pad_to(b.astype(jnp.float32), (1, op)) for b, op in zip(biases, out_pads)]

    # ---- batch tile: big multiple of 8, >=2 grid steps when possible, VMEM budgeted ----
    x_item = jnp.dtype(x2.dtype).itemsize
    w_item = jnp.dtype(matmul_dtype).itemsize
    w_bytes = (sum(int(w.size) * w_item for w in wp)
               + sum(int(b.size) * 4 for b in bp))

    def vmem_bytes(tb):
        return (2 * tb * tile_k * x_item        # input block (double buffered)
                + tb * h0_pad * 4               # f32 accumulator scratch
                + 2 * tb * final_pad * 4        # output block (double buffered)
                + 2 * w_bytes)                  # weights/biases (worst case 2x)

    if tile_b is None:
        tile_b = min(512, _round_up(B, 8))
        if B >= 16:  # leave >=2 batch grid steps so both v7x TensorCores get work
            tile_b = min(tile_b, max(8, _round_up(B, 16) // 2))
    tile_b = max(8, (tile_b // 8) * 8)
    while tile_b > 8 and vmem_bytes(tile_b) > vmem_budget_bytes:
        tile_b -= 8

    b_pad = _round_up(B, tile_b)
    nb = b_pad // tile_b

    x2p = _pad_to(x2, (b_pad, f_pad))

    kernel = make_discriminator_kernel(num_layers, matmul_dtype)
    vmem_limit = int(min(48 * 2 ** 20, max(32 * 2 ** 20, 2 * vmem_bytes(tile_b))))

    def build(single_buffer_consts):
        const_kwargs = ({"pipeline_mode": pl.Buffered(1)}
                        if single_buffer_consts else {})
        in_specs = [pl.BlockSpec((tile_b, tile_k), lambda i, k: (i, k))]
        # Layer-0 weight is blocked along K (pipelined with default buffering).
        in_specs.append(pl.BlockSpec((tile_k, h0_pad), lambda i, k: (k, 0)))
        # Grid-invariant params: constant index map, single-buffered when supported.
        in_specs.append(pl.BlockSpec((1, h0_pad), lambda i, k: (0, 0), **const_kwargs))
        for w, b in zip(wp[1:], bp[1:]):
            in_specs.append(pl.BlockSpec(w.shape, lambda i, k: (0, 0), **const_kwargs))
            in_specs.append(pl.BlockSpec(b.shape, lambda i, k: (0, 0), **const_kwargs))
        out_specs = pl.BlockSpec((tile_b, final_pad), lambda i, k: (i, 0))
        return pl.pallas_call(
            kernel,
            out_shape=jax.ShapeDtypeStruct((b_pad, final_pad), jnp.float32),
            grid=(nb, nk),
            in_specs=in_specs,
            out_specs=out_specs,
            scratch_shapes=[pltpu.VMEM((tile_b, h0_pad), jnp.float32)],
            compiler_params=pltpu.CompilerParams(
                dimension_semantics=("parallel", "arbitrary"),
                vmem_limit_bytes=vmem_limit,
            ),
        )

    args = [x2p]
    for w, b in zip(wp, bp):
        args.append(w)
        args.append(b)

    try:
        out_padded = build(True)(*args)
    except Exception:
        # Fallback if single-buffered constant BlockSpecs are not supported
        # by the installed JAX version.
        out_padded = build(False)(*args)

    return out_padded[:B, :1]


def init_discriminator_params(key, input_features, hidden_layers):
    """Deterministic init mimicking PyTorch nn.Linear default
    (uniform(-1/sqrt(fan_in), 1/sqrt(fan_in))).  Weights stored as (in, out)."""
    dims = [input_features] + list(hidden_layers) + [1]
    weights, biases = [], []
    for i in range(len(dims) - 1):
        fan_in, fan_out = dims[i], dims[i + 1]
        key, kw, kb = jax.random.split(key, 3)
        bound = 1.0 / jnp.sqrt(jnp.float32(fan_in))
        w = jax.random.uniform(kw, (fan_in, fan_out), jnp.float32, -bound, bound)
        b = jax.random.uniform(kb, (1, fan_out), jnp.float32, -bound, bound)
        weights.append(w)
        biases.append(b)
    return weights, biases


def reference_forward(x, weights, biases):
    """Pure-JAX f32 reference matching the PyTorch module."""
    h = x.reshape(x.shape[0], -1).astype(jnp.float32)
    n = len(weights)
    for i, (w, b) in enumerate(zip(weights, biases)):
        h = h @ w + b
        if i < n - 1:
            h = jnp.where(h >= 0.0, h, LEAKY_SLOPE * h)
        else:
            h = 1.0 / (1.0 + jnp.exp(-h))
    return h


if __name__ == "__main__":
    key = jax.random.PRNGKey(0)

    # Module config: Discriminator(input_shape=64, layers=[32, 16]); small shapes.
    batch = 16
    img_shape = (1, 8, 8)           # flattened -> 64 features
    input_features = 1 * 8 * 8
    hidden_layers = [32, 16]

    key, kx, kp = jax.random.split(key, 3)
    x = jax.random.normal(kx, (batch,) + img_shape, dtype=jnp.float32)
    weights, biases = init_discriminator_params(kp, input_features, hidden_layers)

    ref = reference_forward(x, weights, biases)

    # Default path: bf16 MXU inputs, f32 accumulation.
    out_bf16 = jax.block_until_ready(discriminator_forward(x, weights, biases))
    # f32 matmul path: matches the reference up to the approx reciprocal in sigmoid.
    out_f32 = jax.block_until_ready(
        discriminator_forward(x, weights, biases, matmul_dtype=jnp.float32))

    assert out_bf16.shape == (batch, 1) and out_f32.shape == (batch, 1)
    assert jnp.allclose(out_f32, ref, atol=5e-3, rtol=0.0), (
        float(jnp.max(jnp.abs(out_f32 - ref))))
    assert jnp.allclose(out_bf16, ref, atol=2e-2, rtol=0.0), (
        float(jnp.max(jnp.abs(out_bf16 - ref))))

    print("KERNEL_OK")
</pallas_src>

<mosaic_0001>
module attributes {stable_mosaic.version = 11 : i64} {
  func.func @kernel(%arg0: i32, %arg1: i32, %arg2: memref<8x128xf32, #tpu.memory_space<vmem>>, %arg3: memref<128x128xbf16, #tpu.memory_space<vmem>>, %arg4: memref<1x128xf32, #tpu.memory_space<vmem>>, %arg5: memref<128x128xbf16, #tpu.memory_space<vmem>>, %arg6: memref<1x128xf32, #tpu.memory_space<vmem>>, %arg7: memref<128x128xbf16, #tpu.memory_space<vmem>>, %arg8: memref<1x128xf32, #tpu.memory_space<vmem>>, %arg9: memref<8x128xf32, #tpu.memory_space<vmem>>, %arg10: memref<8x128xf32, #tpu.memory_space<vmem>>) attributes {dimension_semantics = [#tpu.dimension_semantics<parallel>, #tpu.dimension_semantics<arbitrary>], iteration_bounds = array<i64: 2, 1>, scalar_prefetch = 0 : i64, scratch_operands = 1 : i64, tpu.core_type = #tpu.core_type<tc>, window_params = [{transform_indices = @transform_0, window_bounds = array<i64: 8, 128>}, {transform_indices = @transform_1, window_bounds = array<i64: 128, 128>}, {pipeline_mode = #tpu.pipeline_mode<synchronous>, transform_indices = @transform_2, window_bounds = array<i64: 1, 128>}, {pipeline_mode = #tpu.pipeline_mode<synchronous>, transform_indices = @transform_3, window_bounds = array<i64: 128, 128>}, {pipeline_mode = #tpu.pipeline_mode<synchronous>, transform_indices = @transform_4, window_bounds = array<i64: 1, 128>}, {pipeline_mode = #tpu.pipeline_mode<synchronous>, transform_indices = @transform_5, window_bounds = array<i64: 128, 128>}, {pipeline_mode = #tpu.pipeline_mode<synchronous>, transform_indices = @transform_6, window_bounds = array<i64: 1, 128>}, {transform_indices = @transform_7, window_bounds = array<i64: 8, 128>}]} {
    %c0_i32 = arith.constant 0 : i32
    %0 = arith.cmpi eq, %arg1, %c0_i32 : i32
    %1 = arith.extui %0 : i1 to i32
    %c0_i32_0 = arith.constant 0 : i32
    %2 = arith.cmpi ne, %1, %c0_i32_0 : i32
    scf.if %2 {
      %cst_10 = arith.constant 0.000000e+00 : f32
      %13 = vector.broadcast %cst_10 : f32 to vector<8x128xf32>
      %c0_11 = arith.constant 0 : index
      %c0_12 = arith.constant 0 : index
      %14 = vector.load %arg10[%c0_11, %c0_12] : memref<8x128xf32, #tpu.memory_space<vmem>>, vector<8x128xf32>
      tpu.vector_store %arg10[%c0_11, %c0_12], %13 {strides = array<i32>} : memref<8x128xf32, #tpu.memory_space<vmem>>, vector<8x128xf32>,
    } else {
    }
    %c0 = arith.constant 0 : index
    %c0_1 = arith.constant 0 : index
    %3 = vector.load %arg2[%c0, %c0_1] : memref<8x128xf32, #tpu.memory_space<vmem>>, vector<8x128xf32>
    %4 = arith.truncf %3 : vector<8x128xf32> to vector<8x128xbf16>
    %c0_2 = arith.constant 0 : index
    %c0_3 = arith.constant 0 : index
    %5 = vector.load %arg3[%c0_2, %c0_3] : memref<128x128xbf16, #tpu.memory_space<vmem>>, vector<128x128xbf16>
    %c0_4 = arith.constant 0 : index
    %c0_5 = arith.constant 0 : index
    %6 = vector.load %arg10[%c0_4, %c0_5] : memref<8x128xf32, #tpu.memory_space<vmem>>, vector<8x128xf32>
    %cst = arith.constant dense<0.000000e+00> : vector<8x128xf32>
    %7 = tpu.matmul %4, %5, %cst {dimension_numbers = #tpu.dot_dimension_numbers<[1], [0], [0], [1], [0, 0, 1, 1], [], []>} : vector<8x128xbf16>, vector<128x128xbf16>, vector<8x128xf32> -> vector<8x128xf32>
    %8 = arith.addf %6, %7 : vector<8x128xf32>
    %c0_6 = arith.constant 0 : index
    %c0_7 = arith.constant 0 : index
    %9 = vector.load %arg10[%c0_6, %c0_7] : memref<8x128xf32, #tpu.memory_space<vmem>>, vector<8x128xf32>
    tpu.vector_store %arg10[%c0_6, %c0_7], %8 {strides = array<i32>} : memref<8x128xf32, #tpu.memory_space<vmem>>, vector<8x128xf32>,
    %c0_i32_8 = arith.constant 0 : i32
    %10 = arith.cmpi eq, %arg1, %c0_i32_8 : i32
    %11 = arith.extui %10 : i1 to i32
    %c0_i32_9 = arith.constant 0 : i32
    %12 = arith.cmpi ne, %11, %c0_i32_9 : i32
    scf.if %12 {
      %c0_10 = arith.constant 0 : index
      %c0_11 = arith.constant 0 : index
      %13 = vector.load %arg10[%c0_10, %c0_11] : memref<8x128xf32, #tpu.memory_space<vmem>>, vector<8x128xf32>
      %c0_12 = arith.constant 0 : index
      %c0_13 = arith.constant 0 : index
      %14 = vector.load %arg4[%c0_12, %c0_13] : memref<1x128xf32, #tpu.memory_space<vmem>>, vector<1x128xf32>
      %15 = vector.broadcast %14 : vector<1x128xf32> to vector<8x128xf32>
      %16 = arith.addf %13, %15 : vector<8x128xf32>
      %cst_14 = arith.constant 0.000000e+00 : f32
      %17 = vector.broadcast %cst_14 : f32 to vector<8x128xf32>
      %18 = arith.cmpf oge, %16, %17 : vector<8x128xf32>
      %cst_15 = arith.constant 0.00999999977 : f32
      %19 = vector.broadcast %cst_15 : f32 to vector<8x128xf32>
      %20 = arith.mulf %19, %16 : vector<8x128xf32>
      %21 = arith.select %18, %16, %20 : vector<8x128xi1>, vector<8x128xf32>
      %c0_16 = arith.constant 0 : index
      %c0_17 = arith.constant 0 : index
      %22 = vector.load %arg5[%c0_16, %c0_17] : memref<128x128xbf16, #tpu.memory_space<vmem>>, vector<128x128xbf16>
      %c0_18 = arith.constant 0 : index
      %c0_19 = arith.constant 0 : index
      %23 = vector.load %arg6[%c0_18, %c0_19] : memref<1x128xf32, #tpu.memory_space<vmem>>, vector<1x128xf32>
      %24 = arith.truncf %21 : vector<8x128xf32> to vector<8x128xbf16>
      %cst_20 = arith.constant dense<0.000000e+00> : vector<8x128xf32>
      %25 = tpu.matmul %24, %22, %cst_20 {dimension_numbers = #tpu.dot_dimension_numbers<[1], [0], [0], [1], [0, 0, 1, 1], [], []>} : vector<8x128xbf16>, vector<128x128xbf16>, vector<8x128xf32> -> vector<8x128xf32>
      %26 = vector.broadcast %23 : vector<1x128xf32> to vector<8x128xf32>
      %27 = arith.addf %25, %26 : vector<8x128xf32>
      %cst_21 = arith.constant 0.000000e+00 : f32
      %28 = vector.broadcast %cst_21 : f32 to vector<8x128xf32>
      %29 = arith.cmpf oge, %27, %28 : vector<8x128xf32>
      %cst_22 = arith.constant 0.00999999977 : f32
      %30 = vector.broadcast %cst_22 : f32 to vector<8x128xf32>
      %31 = arith.mulf %30, %27 : vector<8x128xf32>
      %32 = arith.select %29, %27, %31 : vector<8x128xi1>, vector<8x128xf32>
      %c0_23 = arith.constant 0 : index
      %c0_24 = arith.constant 0 : index
      %33 = vector.load %arg7[%c0_23, %c0_24] : memref<128x128xbf16, #tpu.memory_space<vmem>>, vector<128x128xbf16>
      %c0_25 = arith.constant 0 : index
      %c0_26 = arith.constant 0 : index
      %34 = vector.load %arg8[%c0_25, %c0_26] : memref<1x128xf32, #tpu.memory_space<vmem>>, vector<1x128xf32>
      %35 = arith.truncf %32 : vector<8x128xf32> to vector<8x128xbf16>
      %cst_27 = arith.constant dense<0.000000e+00> : vector<8x128xf32>
      %36 = tpu.matmul %35, %33, %cst_27 {dimension_numbers = #tpu.dot_dimension_numbers<[1], [0], [0], [1], [0, 0, 1, 1], [], []>} : vector<8x128xbf16>, vector<128x128xbf16>, vector<8x128xf32> -> vector<8x128xf32>
      %37 = vector.broadcast %34 : vector<1x128xf32> to vector<8x128xf32>
      %38 = arith.addf %36, %37 : vector<8x128xf32>
      %cst_28 = arith.constant 0.000000e+00 : f32
      %39 = vector.broadcast %cst_28 : f32 to vector<8x128xf32>
      %40 = arith.subf %39, %38 : vector<8x128xf32>
      %41 = math.exp %40 : vector<8x128xf32>
      %cst_29 = arith.constant 1.000000e+00 : f32
      %42 = vector.broadcast %cst_29 : f32 to vector<8x128xf32>
      %43 = arith.addf %42, %41 : vector<8x128xf32>
      %44 = tpu.reciprocal %43 {approx = true} : vector<8x128xf32> -> vector<8x128xf32>
      %c0_30 = arith.constant 0 : index
      %c0_31 = arith.constant 0 : index
      %45 = vector.load %arg9[%c0_30, %c0_31] : memref<8x128xf32, #tpu.memory_space<vmem>>, vector<8x128xf32>
      tpu.vector_store %arg9[%c0_30, %c0_31], %44 {strides = array<i32>} : memref<8x128xf32, #tpu.memory_space<vmem>>, vector<8x128xf32>,
    } else {
    }
    return
  }
  func.func @transform_0(%arg0: i32, %arg1: i32) -> (i32, i32) {
    %c0_i32 = arith.constant 0 : i32
    return %arg0, %arg1 : i32, i32
  }
  func.func @transform_1(%arg0: i32, %arg1: i32) -> (i32, i32) {
    %c0_i32 = arith.constant 0 : i32
    %c0_i32_0 = arith.constant 0 : i32
    return %arg1, %c0_i32 : i32, i32
  }
  func.func @transform_2(%arg0: i32, %arg1: i32) -> (i32, i32) {
    %c0_i32 = arith.constant 0 : i32
    %c0_i32_0 = arith.constant 0 : i32
    %c0_i32_1 = arith.constant 0 : i32
    return %c0_i32, %c0_i32_0 : i32, i32
  }
  func.func @transform_3(%arg0: i32, %arg1: i32) -> (i32, i32) {
    %c0_i32 = arith.constant 0 : i32
    %c0_i32_0 = arith.constant 0 : i32
    %c0_i32_1 = arith.constant 0 : i32
    return %c0_i32, %c0_i32_0 : i32, i32
  }
  func.func @transform_4(%arg0: i32, %arg1: i32) -> (i32, i32) {
    %c0_i32 = arith.constant 0 : i32
    %c0_i32_0 = arith.constant 0 : i32
    %c0_i32_1 = arith.constant 0 : i32
    return %c0_i32, %c0_i32_0 : i32, i32
  }
  func.func @transform_5(%arg0: i32, %arg1: i32) -> (i32, i32) {
    %c0_i32 = arith.constant 0 : i32
    %c0_i32_0 = arith.constant 0 : i32
    %c0_i32_1 = arith.constant 0 : i32
    return %c0_i32, %c0_i32_0 : i32, i32
  }
  func.func @transform_6(%arg0: i32, %arg1: i32) -> (i32, i32) {
    %c0_i32 = arith.constant 0 : i32
    %c0_i32_0 = arith.constant 0 : i32
    %c0_i32_1 = arith.constant 0 : i32
    return %c0_i32, %c0_i32_0 : i32, i32
  }
  func.func @transform_7(%arg0: i32, %arg1: i32) -> (i32, i32) {
    %c0_i32 = arith.constant 0 : i32
    %c0_i32_0 = arith.constant 0 : i32
    return %arg0, %c0_i32 : i32, i32
  }
}

module attributes {stable_mosaic.version = 11 : i64} {
  func.func @kernel(%arg0: i32, %arg1: i32, %arg2: memref<8x128xf32, #tpu.memory_space<vmem>>, %arg3: memref<128x128xbf16, #tpu.memory_space<vmem>>, %arg4: memref<1x128xf32, #tpu.memory_space<vmem>>, %arg5: memref<128x128xbf16, #tpu.memory_space<vmem>>, %arg6: memref<1x128xf32, #tpu.memory_space<vmem>>, %arg7: memref<128x128xbf16, #tpu.memory_space<vmem>>, %arg8: memref<1x128xf32, #tpu.memory_space<vmem>>, %arg9: memref<8x128xf32, #tpu.memory_space<vmem>>, %arg10: memref<8x128xf32, #tpu.memory_space<vmem>>) attributes {dimension_semantics = [#tpu.dimension_semantics<parallel>, #tpu.dimension_semantics<arbitrary>], iteration_bounds = array<i64: 2, 1>, scalar_prefetch = 0 : i64, scratch_operands = 1 : i64, tpu.core_type = #tpu.core_type<tc>, window_params = [{transform_indices = @transform_0, window_bounds = array<i64: 8, 128>}, {transform_indices = @transform_1, window_bounds = array<i64: 128, 128>}, {pipeline_mode = #tpu.pipeline_mode<synchronous>, transform_indices = @transform_2, window_bounds = array<i64: 1, 128>}, {pipeline_mode = #tpu.pipeline_mode<synchronous>, transform_indices = @transform_3, window_bounds = array<i64: 128, 128>}, {pipeline_mode = #tpu.pipeline_mode<synchronous>, transform_indices = @transform_4, window_bounds = array<i64: 1, 128>}, {pipeline_mode = #tpu.pipeline_mode<synchronous>, transform_indices = @transform_5, window_bounds = array<i64: 128, 128>}, {pipeline_mode = #tpu.pipeline_mode<synchronous>, transform_indices = @transform_6, window_bounds = array<i64: 1, 128>}, {transform_indices = @transform_7, window_bounds = array<i64: 8, 128>}]} {
    %c0_i32 = arith.constant 0 : i32
    %0 = arith.cmpi eq, %arg1, %c0_i32 : i32
    %1 = arith.extui %0 : i1 to i32
    %c0_i32_0 = arith.constant 0 : i32
    %2 = arith.cmpi ne, %1, %c0_i32_0 : i32
    scf.if %2 {
      %cst_10 = arith.constant 0.000000e+00 : f32
      %13 = vector.broadcast %cst_10 : f32 to vector<8x128xf32>
      %c0_11 = arith.constant 0 : index
      %c0_12 = arith.constant 0 : index
      %14 = vector.load %arg10[%c0_11, %c0_12] : memref<8x128xf32, #tpu.memory_space<vmem>>, vector<8x128xf32>
      tpu.vector_store %arg10[%c0_11, %c0_12], %13 {strides = array<i32>} : memref<8x128xf32, #tpu.memory_space<vmem>>, vector<8x128xf32>,
    } else {
    }
    %c0 = arith.constant 0 : index
    %c0_1 = arith.constant 0 : index
    %3 = vector.load %arg2[%c0, %c0_1] : memref<8x128xf32, #tpu.memory_space<vmem>>, vector<8x128xf32>
    %4 = arith.truncf %3 : vector<8x128xf32> to vector<8x128xbf16>
    %c0_2 = arith.constant 0 : index
    %c0_3 = arith.constant 0 : index
    %5 = vector.load %arg3[%c0_2, %c0_3] : memref<128x128xbf16, #tpu.memory_space<vmem>>, vector<128x128xbf16>
    %c0_4 = arith.constant 0 : index
    %c0_5 = arith.constant 0 : index
    %6 = vector.load %arg10[%c0_4, %c0_5] : memref<8x128xf32, #tpu.memory_space<vmem>>, vector<8x128xf32>
    %cst = arith.constant dense<0.000000e+00> : vector<8x128xf32>
    %7 = tpu.matmul %4, %5, %cst {dimension_numbers = #tpu.dot_dimension_numbers<[1], [0], [0], [1], [0, 0, 1, 1], [], []>} : vector<8x128xbf16>, vector<128x128xbf16>, vector<8x128xf32> -> vector<8x128xf32>
    %8 = arith.addf %6, %7 : vector<8x128xf32>
    %c0_6 = arith.constant 0 : index
    %c0_7 = arith.constant 0 : index
    %9 = vector.load %arg10[%c0_6, %c0_7] : memref<8x128xf32, #tpu.memory_space<vmem>>, vector<8x128xf32>
    tpu.vector_store %arg10[%c0_6, %c0_7], %8 {strides = array<i32>} : memref<8x128xf32, #tpu.memory_space<vmem>>, vector<8x128xf32>,
    %c0_i32_8 = arith.constant 0 : i32
    %10 = arith.cmpi eq, %arg1, %c0_i32_8 : i32
    %11 = arith.extui %10 : i1 to i32
    %c0_i32_9 = arith.constant 0 : i32
    %12 = arith.cmpi ne, %11, %c0_i32_9 : i32
    scf.if %12 {
      %c0_10 = arith.constant 0 : index
      %c0_11 = arith.constant 0 : index
      %13 = vector.load %arg10[%c0_10, %c0_11] : memref<8x128xf32, #tpu.memory_space<vmem>>, vector<8x128xf32>
      %c0_12 = arith.constant 0 : index
      %c0_13 = arith.constant 0 : index
      %14 = vector.load %arg4[%c0_12, %c0_13] : memref<1x128xf32, #tpu.memory_space<vmem>>, vector<1x128xf32>
      %15 = vector.broadcast %14 : vector<1x128xf32> to vector<8x128xf32>
      %16 = arith.addf %13, %15 : vector<8x128xf32>
      %cst_14 = arith.constant 0.000000e+00 : f32
      %17 = vector.broadcast %cst_14 : f32 to vector<8x128xf32>
      %18 = arith.cmpf oge, %16, %17 : vector<8x128xf32>
      %cst_15 = arith.constant 0.00999999977 : f32
      %19 = vector.broadcast %cst_15 : f32 to vector<8x128xf32>
      %20 = arith.mulf %19, %16 : vector<8x128xf32>
      %21 = arith.select %18, %16, %20 : vector<8x128xi1>, vector<8x128xf32>
      %c0_16 = arith.constant 0 : index
      %c0_17 = arith.constant 0 : index
      %22 = vector.load %arg5[%c0_16, %c0_17] : memref<128x128xbf16, #tpu.memory_space<vmem>>, vector<128x128xbf16>
      %c0_18 = arith.constant 0 : index
      %c0_19 = arith.constant 0 : index
      %23 = vector.load %arg6[%c0_18, %c0_19] : memref<1x128xf32, #tpu.memory_space<vmem>>, vector<1x128xf32>
      %24 = arith.truncf %21 : vector<8x128xf32> to vector<8x128xbf16>
      %cst_20 = arith.constant dense<0.000000e+00> : vector<8x128xf32>
      %25 = tpu.matmul %24, %22, %cst_20 {dimension_numbers = #tpu.dot_dimension_numbers<[1], [0], [0], [1], [0, 0, 1, 1], [], []>} : vector<8x128xbf16>, vector<128x128xbf16>, vector<8x128xf32> -> vector<8x128xf32>
      %26 = vector.broadcast %23 : vector<1x128xf32> to vector<8x128xf32>
      %27 = arith.addf %25, %26 : vector<8x128xf32>
      %cst_21 = arith.constant 0.000000e+00 : f32
      %28 = vector.broadcast %cst_21 : f32 to vector<8x128xf32>
      %29 = arith.cmpf oge, %27, %28 : vector<8x128xf32>
      %cst_22 = arith.constant 0.00999999977 : f32
      %30 = vector.broadcast %cst_22 : f32 to vector<8x128xf32>
      %31 = arith.mulf %30, %27 : vector<8x128xf32>
      %32 = arith.select %29, %27, %31 : vector<8x128xi1>, vector<8x128xf32>
      %c0_23 = arith.constant 0 : index
      %c0_24 = arith.constant 0 : index
      %33 = vector.load %arg7[%c0_23, %c0_24] : memref<128x128xbf16, #tpu.memory_space<vmem>>, vector<128x128xbf16>
      %c0_25 = arith.constant 0 : index
      %c0_26 = arith.constant 0 : index
      %34 = vector.load %arg8[%c0_25, %c0_26] : memref<1x128xf32, #tpu.memory_space<vmem>>, vector<1x128xf32>
      %35 = arith.truncf %32 : vector<8x128xf32> to vector<8x128xbf16>
      %cst_27 = arith.constant dense<0.000000e+00> : vector<8x128xf32>
      %36 = tpu.matmul %35, %33, %cst_27 {dimension_numbers = #tpu.dot_dimension_numbers<[1], [0], [0], [1], [0, 0, 1, 1], [], []>} : vector<8x128xbf16>, vector<128x128xbf16>, vector<8x128xf32> -> vector<8x128xf32>
      %37 = vector.broadcast %34 : vector<1x128xf32> to vector<8x128xf32>
      %38 = arith.addf %36, %37 : vector<8x128xf32>
      %cst_28 = arith.constant 0.000000e+00 : f32
      %39 = vector.broadcast %cst_28 : f32 to vector<8x128xf32>
      %40 = arith.subf %39, %38 : vector<8x128xf32>
      %41 = math.exp %40 : vector<8x128xf32>
      %cst_29 = arith.constant 1.000000e+00 : f32
      %42 = vector.broadcast %cst_29 : f32 to vector<8x128xf32>
      %43 = arith.addf %42, %41 : vector<8x128xf32>
      %44 = tpu.reciprocal %43 {approx = true} : vector<8x128xf32> -> vector<8x128xf32>
      %c0_30 = arith.constant 0 : index
      %c0_31 = arith.constant 0 : index
      %45 = vector.load %arg9[%c0_30, %c0_31] : memref<8x128xf32, #tpu.memory_space<vmem>>, vector<8x128xf32>
      tpu.vector_store %arg9[%c0_30, %c0_31], %44 {strides = array<i32>} : memref<8x128xf32, #tpu.memory_space<vmem>>, vector<8x128xf32>,
    } else {
    }
    return
  }
  func.func @transform_0(%arg0: i32, %arg1: i32) -> (i32, i32) {
    %c0_i32 = arith.constant 0 : i32
    return %arg0, %arg1 : i32, i32
  }
  func.func @transform_1(%arg0: i32, %arg1: i32) -> (i32, i32) {
    %c0_i32 = arith.constant 0 : i32
    %c0_i32_0 = arith.constant 0 : i32
    return %arg1, %c0_i32 : i32, i32
  }
  func.func @transform_2(%arg0: i32, %arg1: i32) -> (i32, i32) {
    %c0_i32 = arith.constant 0 : i32
    %c0_i32_0 = arith.constant 0 : i32
    %c0_i32_1 = arith.constant 0 : i32
    return %c0_i32, %c0_i32_0 : i32, i32
  }
  func.func @transform_3(%arg0: i32, %arg1: i32) -> (i32, i32) {
    %c0_i32 = arith.constant 0 : i32
    %c0_i32_0 = arith.constant 0 : i32
    %c0_i32_1 = arith.constant 0 : i32
    return %c0_i32, %c0_i32_0 : i32, i32
  }
  func.func @transform_4(%arg0: i32, %arg1: i32) -> (i32, i32) {
    %c0_i32 = arith.constant 0 : i32
    %c0_i32_0 = arith.constant 0 : i32
    %c0_i32_1 = arith.constant 0 : i32
    return %c0_i32, %c0_i32_0 : i32, i32
  }
  func.func @transform_5(%arg0: i32, %arg1: i32) -> (i32, i32) {
    %c0_i32 = arith.constant 0 : i32
    %c0_i32_0 = arith.constant 0 : i32
    %c0_i32_1 = arith.constant 0 : i32
    return %c0_i32, %c0_i32_0 : i32, i32
  }
  func.func @transform_6(%arg0: i32, %arg1: i32) -> (i32, i32) {
    %c0_i32 = arith.constant 0 : i32
    %c0_i32_0 = arith.constant 0 : i32
    %c0_i32_1 = arith.constant 0 : i32
    return %c0_i32, %c0_i32_0 : i32, i32
  }
  func.func @transform_7(%arg0: i32, %arg1: i32) -> (i32, i32) {
    %c0_i32 = arith.constant 0 : i32
    %c0_i32_0 = arith.constant 0 : i32
    return %arg0, %c0_i32 : i32, i32
  }
}

</mosaic_0001>

<llo_original>
// kernel: tpu_custom_call.1
$region0: #{tpu_custom_call.1}
  #allocation0 [shape = 'u32[]', space=smem, size = 0x4, offset = 0x4, fixed_abs, tag = 'smem constant byte address 0x4 - core index']
  #allocation1 [shape = 'u32[144,128]{1,0:T(1,128)}', space=vmem, size = 0x12000, scoped, tag = 'internal scratch']
  #allocation2 [shape = 'f32[8,128]{1,0:T(8,128)}', space=vmem, size = 0x1000, scoped, tag = 'scratch operand']
  %s0 = inlined_call_operand.hbm [shape: f32[16,128], index: 0, kind: input, shape index: {}]
  %s1 = inlined_call_operand.hbm [shape: bf16[128,128], index: 1, kind: input, shape index: {}]
  %s2 = inlined_call_operand.vmem [shape: f32[1,128], index: 2, kind: input, shape index: {}]
  %s3 = inlined_call_operand.hbm [shape: bf16[128,128], index: 3, kind: input, shape index: {}]
  %s4 = inlined_call_operand.vmem [shape: f32[1,128], index: 4, kind: input, shape index: {}]
  %s5 = inlined_call_operand.hbm [shape: bf16[128,128], index: 5, kind: input, shape index: {}]
  %s6 = inlined_call_operand.vmem [shape: f32[1,128], index: 6, kind: input, shape index: {}]
  %s7 = inlined_call_operand.hbm [shape: f32[16,128], index: 7, kind: output, shape index: {}]
  %s8 = sld [smem:[#allocation0]]
  $region85: #{tpu_custom_call.1} parent=0
    _
  %s10 = ssub.s32 1, %s8
  %s11 = scalar_select 0, %s10, %s8
  $region1: #{tpu_custom_call.1} parent=0
    #allocation3 [shape = 'u8[8192]{0}', space=vmem, size = 0x2000, scoped, tag = 'input window, operand 0']
    #allocation4 [shape = 's32[2]{0}', space=sflag, size = 0x8, scoped, tag = 'scoped memory for tpu_custom_call.1']
    #allocation5 [shape = 's32[2]{0}', space=sflag, size = 0x8, scoped, tag = 'scoped memory for tpu_custom_call.1']
    #allocation6 [shape = 'u8[32768]{0}', space=vmem, size = 0x8000, scoped, tag = 'input window, operand 1, single buffered']
    #allocation7 [shape = 's32[1]{0}', space=sflag, size = 0x4, scoped, tag = 'scoped memory for tpu_custom_call.1']
    #allocation8 [shape = 'u8[32768]{0}', space=vmem, size = 0x8000, scoped, tag = 'input window, operand 3, single buffered']
    #allocation9 [shape = 'u8[32768]{0}', space=vmem, size = 0x8000, scoped, tag = 'input window, operand 5, single buffered']
    #allocation10 [shape = 's32[1]{0}', space=sflag, size = 0x4, scoped, tag = 'scoped memory for tpu_custom_call.1']
    #allocation11 [shape = 'u8[8192]{0}', space=vmem, size = 0x2000, scoped, tag = 'output window, operand 0']
    %12 = vsyncpa [#allocation4], 0
    %s13 = scalar_lea.sflag [#allocation4], 1
    %14 = vsyncpa %s13, 0
    %15 = vsyncpa [#allocation7], 0
    %16 = vsyncpa [#allocation10], 0
    %17 = vsyncpa [#allocation5], 0
    %s18 = scalar_lea.sflag [#allocation5], 1
    %19 = vsyncpa %s18, 0
    loop: start=0, step=1, limit=4
    $region2: #{tpu_custom_call.1} parent=1 // loop_pre_header
      _
    $region3: #{tpu_custom_call.1} parent=1 // loop_header
      %s21 = sphi 0, %s25
      %p22 = scmp.ge.s32.totalorder %s21, 4
      %s28 = sphi 0, %s40
      %s29 = sphi 0, %s36
      %s30 = sphi 0, %s28
      %s31 = sphi 0, %s29
      %s32 = sphi 0, %s30
      %s33 = sphi 0, %s31
      %s45 = sphi 0, %s47
      %s48 = sphi 0, %s45
      %s49 = sphi 0, %s48
      %s65 = sphi 0, %s49
      %s71 = sphi 0, %s73
      %s74 = sphi 0, %s71
      %s75 = sphi 0, %s74
      %s91 = sphi 0, %s75
      %s95 = sphi 0, %s95
      %s97 = sphi 0, %s95
      %s98 = sphi 0, %s97
      %s112 = sphi 0, %s98
      %s116 = sphi 0, %s116
      %s118 = sphi 0, %s116
      %s119 = sphi 0, %s118
      %s133 = sphi 0, %s119
      %s137 = sphi 0, %s137
      %s139 = sphi 0, %s137
      %s140 = sphi 0, %s139
      %s154 = sphi 0, %s140
      %s158 = sphi 0, %s158
      %s160 = sphi 0, %s158
      %s161 = sphi 0, %s160
      %s175 = sphi 0, %s161
      %s179 = sphi 0, %s179
      %s181 = sphi 0, %s179
      %s182 = sphi 0, %s181
      %s196 = sphi 0, %s182
      %s202 = sphi 0, %s204
      %s205 = sphi 0, %s202
      %s206 = sphi 0, %s205
      %s222 = sphi 0, %s206
    $region4: #{tpu_custom_call.1} parent=1 // loop_header_branch
      %24 = sbr.rel (%p22) target = $region8
    $region5: #{tpu_custom_call.1} parent=1 // loop_body
      %s26 = ssub.s32 %s21, 1
      %s27 = ssub.s32 %s21, 2
      %s34 = sadd.s32 1, %s29
      %p35 = scmp.ge.s32.totalorder %s34, 1
      %s36 = scalar_select %p35, 0, %s34
      %s37 = sadd.s32 1, %s28
      %s38 = scalar_select %p35, %s37, %s28
      %p39 = scmp.ge.s32.totalorder %s38, 2
      %s40 = scalar_select %p39, 0, %s38
      %s41 = ssub.s32 %s28, %s40
      %s42 = ssub.s32 %s29, %s36
      %s43 = sor.u32 %s41, %s42
      %p44 = scmp.eq.s32.totalorder %s43, 0
      %s46 = sadd.s32 %s45, 1
      %s47 = scalar_select %p44, %s45, %s46
      %p50 = pneg %p44
      %p51 = scmp.eq.s32.totalorder %s21, 1
      %p52 = por %p50, %p51
      %p53 = scmp.ne.s32.totalorder %s45, %s48
      %p54 = scmp.eq.s32.totalorder %s21, 0
      %p55 = por %p53, %p54
      %p56 = scmp.ne.s32.totalorder %s45, %s48
      %p57 = scmp.eq.s32.totalorder %s26, 1
      %p58 = por %p56, %p57
      %p59 = scmp.ne.s32.totalorder %s48, %s49
      %p60 = scmp.eq.s32.totalorder %s26, 0
      %p61 = por %p59, %p60
      %p62 = scmp.ne.s32.totalorder %s48, %s49
      %p63 = scmp.eq.s32.totalorder %s27, 1
      %p64 = por %p62, %p63
      %p66 = scmp.ne.s32.totalorder %s49, %s65
      %p67 = scmp.eq.s32.totalorder %s27, 0
      %p68 = por %p66, %p67
      %s69 = ssub.s32 %s29, %s36
      %p70 = scmp.eq.s32.totalorder %s69, 0
      %s72 = sadd.s32 %s71, 1
      %s73 = scalar_select %p70, %s71, %s72
      %p76 = pneg %p70
      %p77 = scmp.eq.s32.totalorder %s21, 1
      %p78 = por %p76, %p77
      %p79 = scmp.ne.s32.totalorder %s71, %s74
      %p80 = scmp.eq.s32.totalorder %s21, 0
      %p81 = por %p79, %p80
      %p82 = scmp.ne.s32.totalorder %s71, %s74
      %p83 = scmp.eq.s32.totalorder %s26, 1
      %p84 = por %p82, %p83
      %p85 = scmp.ne.s32.totalorder %s74, %s75
      %p86 = scmp.eq.s32.totalorder %s26, 0
      %p87 = por %p85, %p86
      %p88 = scmp.ne.s32.totalorder %s74, %s75
      %p89 = scmp.eq.s32.totalorder %s27, 1
      %p90 = por %p88, %p89
      %p92 = scmp.ne.s32.totalorder %s75, %s91
      %p93 = scmp.eq.s32.totalorder %s27, 0
      %p94 = por %p92, %p93
      %s96 = sadd.s32 %s95, 1
      %p99 = scmp.eq.s32.totalorder %s21, 1
      %p100 = scmp.ne.s32.totalorder %s95, %s97
      %p101 = scmp.eq.s32.totalorder %s21, 0
      %p102 = por %p100, %p101
      %p103 = scmp.ne.s32.totalorder %s95, %s97
      %p104 = scmp.eq.s32.totalorder %s26, 1
      %p105 = por %p103, %p104
      %p106 = scmp.ne.s32.totalorder %s97, %s98
      %p107 = scmp.eq.s32.totalorder %s26, 0
      %p108 = por %p106, %p107
      %p109 = scmp.ne.s32.totalorder %s97, %s98
      %p110 = scmp.eq.s32.totalorder %s27, 1
      %p111 = por %p109, %p110
      %p113 = scmp.ne.s32.totalorder %s98, %s112
      %p114 = scmp.eq.s32.totalorder %s27, 0
      %p115 = por %p113, %p114
      %s117 = sadd.s32 %s116, 1
      %p120 = scmp.eq.s32.totalorder %s21, 1
      %p121 = scmp.ne.s32.totalorder %s116, %s118
      %p122 = scmp.eq.s32.totalorder %s21, 0
      %p123 = por %p121, %p122
      %p124 = scmp.ne.s32.totalorder %s116, %s118
      %p125 = scmp.eq.s32.totalorder %s26, 1
      %p126 = por %p124, %p125
      %p127 = scmp.ne.s32.totalorder %s118, %s119
      %p128 = scmp.eq.s32.totalorder %s26, 0
      %p129 = por %p127, %p128
      %p130 = scmp.ne.s32.totalorder %s118, %s119
      %p131 = scmp.eq.s32.totalorder %s27, 1
      %p132 = por %p130, %p131
      %p134 = scmp.ne.s32.totalorder %s119, %s133
      %p135 = scmp.eq.s32.totalorder %s27, 0
      %p136 = por %p134, %p135
      %s138 = sadd.s32 %s137, 1
      %p141 = scmp.eq.s32.totalorder %s21, 1
      %p142 = scmp.ne.s32.totalorder %s137, %s139
      %p143 = scmp.eq.s32.totalorder %s21, 0
      %p144 = por %p142, %p143
      %p145 = scmp.ne.s32.totalorder %s137, %s139
      %p146 = scmp.eq.s32.totalorder %s26, 1
      %p147 = por %p145, %p146
      %p148 = scmp.ne.s32.totalorder %s139, %s140
      %p149 = scmp.eq.s32.totalorder %s26, 0
      %p150 = por %p148, %p149
      %p151 = scmp.ne.s32.totalorder %s139, %s140
      %p152 = scmp.eq.s32.totalorder %s27, 1
      %p153 = por %p151, %p152
      %p155 = scmp.ne.s32.totalorder %s140, %s154
      %p156 = scmp.eq.s32.totalorder %s27, 0
      %p157 = por %p155, %p156
      %s159 = sadd.s32 %s158, 1
      %p162 = scmp.eq.s32.totalorder %s21, 1
      %p163 = scmp.ne.s32.totalorder %s158, %s160
      %p164 = scmp.eq.s32.totalorder %s21, 0
      %p165 = por %p163, %p164
      %p166 = scmp.ne.s32.totalorder %s158, %s160
      %p167 = scmp.eq.s32.totalorder %s26, 1
      %p168 = por %p166, %p167
      %p169 = scmp.ne.s32.totalorder %s160, %s161
      %p170 = scmp.eq.s32.totalorder %s26, 0
      %p171 = por %p169, %p170
      %p172 = scmp.ne.s32.totalorder %s160, %s161
      %p173 = scmp.eq.s32.totalorder %s27, 1
      %p174 = por %p172, %p173
      %p176 = scmp.ne.s32.totalorder %s161, %s175
      %p177 = scmp.eq.s32.totalorder %s27, 0
      %p178 = por %p176, %p177
      %s180 = sadd.s32 %s179, 1
      %p183 = scmp.eq.s32.totalorder %s21, 1
      %p184 = scmp.ne.s32.totalorder %s179, %s181
      %p185 = scmp.eq.s32.totalorder %s21, 0
      %p186 = por %p184, %p185
      %p187 = scmp.ne.s32.totalorder %s179, %s181
      %p188 = scmp.eq.s32.totalorder %s26, 1
      %p189 = por %p187, %p188
      %p190 = scmp.ne.s32.totalorder %s181, %s182
      %p191 = scmp.eq.s32.totalorder %s26, 0
      %p192 = por %p190, %p191
      %p193 = scmp.ne.s32.totalorder %s181, %s182
      %p194 = scmp.eq.s32.totalorder %s27, 1
      %p195 = por %p193, %p194
      %p197 = scmp.ne.s32.totalorder %s182, %s196
      %p198 = scmp.eq.s32.totalorder %s27, 0
      %p199 = por %p197, %p198
      %s200 = ssub.s32 %s28, %s40
      %p201 = scmp.eq.s32.totalorder %s200, 0
      %s203 = sadd.s32 %s202, 1
      %s204 = scalar_select %p201, %s202, %s203
      %p207 = pneg %p201
      %p208 = scmp.eq.s32.totalorder %s21, 1
      %p209 = por %p207, %p208
      %p210 = scmp.ne.s32.totalorder %s202, %s205
      %p211 = scmp.eq.s32.totalorder %s21, 0
      %p212 = por %p210, %p211
      %p213 = scmp.ne.s32.totalorder %s202, %s205
      %p214 = scmp.eq.s32.totalorder %s26, 1
      %p215 = por %p213, %p214
      %p216 = scmp.ne.s32.totalorder %s205, %s206
      %p217 = scmp.eq.s32.totalorder %s26, 0
      %p218 = por %p216, %p217
      %p219 = scmp.ne.s32.totalorder %s205, %s206
      %p220 = scmp.eq.s32.totalorder %s27, 1
      %p221 = por %p219, %p220
      %p223 = scmp.ne.s32.totalorder %s206, %s222
      %p224 = scmp.eq.s32.totalorder %s27, 0
      %p225 = por %p223, %p224
      %p226 = scmp.le.s32.totalorder 1, %s21
      %p227 = scmp.lt.s32.totalorder %s21, 3
      %p228 = pnand %p226, %p227
      %p229 = pneg %p228
      // Predicated region
      $region9: #{tpu_custom_call.1} parent=5 // pred_check
        _
      $region10: #{tpu_custom_call.1} parent=5 // pred_check_branch
        %231 = sbr.rel (%p228) target = $region12
      $region11: #{tpu_custom_call.1} parent=5 // pred_region
        %s232 = ssub.s32 %s21, 1
        // Predicated region
        $region13: #{tpu_custom_call.1} parent=11 // pred_check
          %p233 = pneg %p87
        $region14: #{tpu_custom_call.1} parent=11 // pred_check_branch
          %235 = sbr.rel (%p233) target = $region16
        $region15: #{tpu_custom_call.1} parent=11 // pred_region
          %s236 = smul.u32 16, %s31
          %s238 = ssub.s32 1024, 1024
          %239 = vsyncadd [#allocation7], %s238
          %s240 = smul.addr %s236, 64
          %s241 = scalar_lea.hbm %s1, %s240
          %s242 = sshll.u32 [#allocation6], 4
          %s243 = int_to_ptr.vmem [resolvable:$true] %s242
          %248 = dma.hbm_to_vmem [thread:$0]  %s241, 1024, %s243, [#allocation7], 64, 64, 4
        $region16: #{tpu_custom_call.1} parent=11 // pred_fallthru
          _
        // Predicated region
        $region17: #{tpu_custom_call.1} parent=11 // pred_check
          %p249 = pneg %p108
        $region18: #{tpu_custom_call.1} parent=11 // pred_check_branch
          %251 = sbr.rel (%p249) target = $region20
        $region19: #{tpu_custom_call.1} parent=11 // pred_region
          _
        $region20: #{tpu_custom_call.1} parent=11 // pred_fallthru
          _
        // Predicated region
        $region21: #{tpu_custom_call.1} parent=11 // pred_check
          %p252 = pneg %p129
        $region22: #{tpu_custom_call.1} parent=11 // pred_check_branch
          %254 = sbr.rel (%p252) target = $region24
        $region23: #{tpu_custom_call.1} parent=11 // pred_region
          %s256 = ssub.s32 1024, 1024
          %257 = vsyncadd [#allocation7], %s256
          %s258 = sshll.u32 [#allocation8], 4
          %s259 = int_to_ptr.vmem [resolvable:$true] %s258
          %264 = dma.hbm_to_vmem [thread:$0]  %s3, 1024, %s259, [#allocation7], 64, 64, 4
        $region24: #{tpu_custom_call.1} parent=11 // pred_fallthru
          _
        // Predicated region
        $region25: #{tpu_custom_call.1} parent=11 // pred_check
          %p265 = pneg %p150
        $region26: #{tpu_custom_call.1} parent=11 // pred_check_branch
          %267 = sbr.rel (%p265) target = $region28
        $region27: #{tpu_custom_call.1} parent=11 // pred_region
          _
        $region28: #{tpu_custom_call.1} parent=11 // pred_fallthru
          _
        // Predicated region
        $region29: #{tpu_custom_call.1} parent=11 // pred_check
          %p268 = pneg %p171
        $region30: #{tpu_custom_call.1} parent=11 // pred_check_branch
          %270 = sbr.rel (%p268) target = $region32
        $region31: #{tpu_custom_call.1} parent=11 // pred_region
          %s272 = ssub.s32 1024, 1024
          %273 = vsyncadd [#allocation10], %s272
          %s274 = sshll.u32 [#allocation9], 4
          %s275 = int_to_ptr.vmem [resolvable:$true] %s274
          %280 = dma.hbm_to_vmem [thread:$0]  %s5, 1024, %s275, [#allocation10], 64, 64, 4
        $region32: #{tpu_custom_call.1} parent=11 // pred_fallthru
          _
        // Predicated region
        $region33: #{tpu_custom_call.1} parent=11 // pred_check
          %p281 = pneg %p192
        $region34: #{tpu_custom_call.1} parent=11 // pred_check_branch
          %283 = sbr.rel (%p281) target = $region36
        $region35: #{tpu_custom_call.1} parent=11 // pred_region
          _
        $region36: #{tpu_custom_call.1} parent=11 // pred_fallthru
          _
      $region12: #{tpu_custom_call.1} parent=5 // pred_fallthru
        _
      %p284 = scmp.lt.s32.totalorder %s21, 2
      // Predicated region
      $region37: #{tpu_custom_call.1} parent=5 // pred_check
        %p285 = pneg %p284
      $region38: #{tpu_custom_call.1} parent=5 // pred_check_branch
        %287 = sbr.rel (%p285) target = $region40
      $region39: #{tpu_custom_call.1} parent=5 // pred_region
        // Predicated region
        $region41: #{tpu_custom_call.1} parent=39 // pred_check
          %p288 = pneg %p55
        $region42: #{tpu_custom_call.1} parent=39 // pred_check_branch
          %290 = sbr.rel (%p288) target = $region44
        $region43: #{tpu_custom_call.1} parent=39 // pred_region
          %s291 = sand.u32 %s45, 1
          %s292 = scalar_lea.sflag [#allocation4], %s291
          %s293 = sand.u32 %s45, 1
          %s294 = smul.addr %s293, 8
          %s295 = scalar_lea.vmem [#allocation3], %s294
          %s297 = ssub.s32 128, 128
          %298 = vsyncadd %s292, %s297
          %s299 = sadd.s32 %s29, %s28
          %s300 = smul.addr %s299, 128
          %s301 = scalar_lea.hbm %s0, %s300
          %s303 = sshll.u32 %s295, 4
          %s304 = int_to_ptr.vmem [resolvable:$true] %s303
          %306 = dma.hbm_to_vmem [thread:$0]  %s301, 128, %s304, %s292
        $region44: #{tpu_custom_call.1} parent=39 // pred_fallthru
          _
      $region40: #{tpu_custom_call.1} parent=5 // pred_fallthru
        _
      %p307 = scmp.le.s32.totalorder 1, %s21
      %p308 = scmp.lt.s32.totalorder %s21, 3
      %p309 = pnand %p307, %p308
      %p310 = pneg %p309
      // Predicated region
      $region45: #{tpu_custom_call.1} parent=5 // pred_check
        _
      $region46: #{tpu_custom_call.1} parent=5 // pred_check_branch
        %312 = sbr.rel (%p309) target = $region48
      $region47: #{tpu_custom_call.1} parent=5 // pred_region
        %s313 = ssub.s32 %s21, 1
        %s314 = sand.u32 %s48, 1
        %s315 = scalar_lea.sflag [#allocation4], %s314
        %s316 = sand.u32 %s48, 1
        %s317 = smul.addr %s316, 8
        %s318 = scalar_lea.vmem [#allocation3], %s317
        // Predicated region
        $region49: #{tpu_custom_call.1} parent=47 // pred_check
          %p319 = pneg %p61
        $region50: #{tpu_custom_call.1} parent=47 // pred_check_branch
          %321 = sbr.rel (%p319) target = $region52
        $region51: #{tpu_custom_call.1} parent=47 // pred_region
          %322 = dma.done %s315, 128
        $region52: #{tpu_custom_call.1} parent=47 // pred_fallthru
          _
        // Predicated region
        $region53: #{tpu_custom_call.1} parent=47 // pred_check
          %p323 = pneg %p87
        $region54: #{tpu_custom_call.1} parent=47 // pred_check_branch
          %325 = sbr.rel (%p323) target = $region56
        $region55: #{tpu_custom_call.1} parent=47 // pred_region
          %326 = dma.done [#allocation7], 1024
        $region56: #{tpu_custom_call.1} parent=47 // pred_fallthru
          _
        // Predicated region
        $region57: #{tpu_custom_call.1} parent=47 // pred_check
          %p327 = pneg %p129
        $region58: #{tpu_custom_call.1} parent=47 // pred_check_branch
          %329 = sbr.rel (%p327) target = $region60
        $region59: #{tpu_custom_call.1} parent=47 // pred_region
          %330 = dma.done [#allocation7], 1024
        $region60: #{tpu_custom_call.1} parent=47 // pred_fallthru
          _
        // Predicated region
        $region61: #{tpu_custom_call.1} parent=47 // pred_check
          %p331 = pneg %p171
        $region62: #{tpu_custom_call.1} parent=47 // pred_check_branch
          %333 = sbr.rel (%p331) target = $region64
        $region63: #{tpu_custom_call.1} parent=47 // pred_region
          %334 = dma.done [#allocation10], 1024
        $region64: #{tpu_custom_call.1} parent=47 // pred_fallthru
          _
        %s335 = sand.u32 %s48, 1
        %s336 = scalar_lea.sflag [#allocation4], %s335
        %s337 = sand.u32 %s48, 1
        %s338 = smul.addr %s337, 8
        %s339 = scalar_lea.vmem [#allocation3], %s338
        %p340 = pneg %p61
        %p341 = pneg %p58
        %p342 = pneg %p87
        %p343 = pneg %p84
        %p344 = pneg %p108
        %p345 = pneg %p105
        %p346 = pneg %p129
        %p347 = pneg %p126
        %p348 = pneg %p150
        %p349 = pneg %p147
        %p350 = pneg %p171
        %p351 = pneg %p168
        %p352 = pneg %p192
        %p353 = pneg %p189
        %p354 = pneg %p218
        %p355 = pneg %p215
        %s356 = sand.u32 %s205, 1
        %s357 = scalar_lea.sflag [#allocation5], %s356
        %s358 = sand.u32 %s205, 1
        %s359 = smul.addr %s358, 8
        %s360 = scalar_lea.vmem [#allocation11], %s359
        %s361 = smul.u32 16, %s31
        %p363 = scmp.eq.s32.totalorder %s31, 0
        // Predicated region
        $region65: #{tpu_custom_call.1} parent=47 // pred_check
          %p364 = pneg %p363
        $region66: #{tpu_custom_call.1} parent=47 // pred_check_branch
          %366 = sbr.rel (%p364) target = $region68
        $region67: #{tpu_custom_call.1} parent=47 // pred_region
          %367 = vst [vmem:[#allocation2] sm:$0xff] 0.0
        $region68: #{tpu_custom_call.1} parent=47 // pred_fallthru
          _
        %v368 = vld [vmem:[%s318] sm:$0xff]
        %v369 = vpack.c.bf16 %v368, %v368
        %v370 = vld [vmem:[#allocation6] sm:$0xf]
        %v371 = vld [vmem:[#allocation6 + $0x4] sm:$0xf]
        %v372 = vld [vmem:[#allocation6 + $0x8] sm:$0xf]
        %v373 = vld [vmem:[#allocation6 + $0xc] sm:$0xf]
        %v374 = vld [vmem:[#allocation6 + $0x10] sm:$0xf]
        %v375 = vld [vmem:[#allocation6 + $0x14] sm:$0xf]
        %v376 = vld [vmem:[#allocation6 + $0x18] sm:$0xf]
        %v377 = vld [vmem:[#allocation6 + $0x1c] sm:$0xf]
        %v378 = vld [vmem:[#allocation6 + $0x20] sm:$0xf]
        %v379 = vld [vmem:[#allocation6 + $0x24] sm:$0xf]
        %v380 = vld [vmem:[#allocation6 + $0x28] sm:$0xf]
        %v381 = vld [vmem:[#allocation6 + $0x2c] sm:$0xf]
        %v382 = vld [vmem:[#allocation6 + $0x30] sm:$0xf]
        %v383 = vld [vmem:[#allocation6 + $0x34] sm:$0xf]
        %v384 = vld [vmem:[#allocation6 + $0x38] sm:$0xf]
        %v385 = vld [vmem:[#allocation6 + $0x3c] sm:$0xf]
        %v386 = vld [vmem:[#allocation2] sm:$0xff]
        %v403 = vunpack.c.l.b16 %v370
        %v404 = vunpack.c.l.b16 %v371
        %v405 = vunpack.c.l.b16 %v372
        %v406 = vunpack.c.l.b16 %v373
        %v407 = vunpack.c.l.b16 %v374
        %v408 = vunpack.c.l.b16 %v375
        %v409 = vunpack.c.l.b16 %v376
        %v410 = vunpack.c.l.b16 %v377
        %v411 = vunpack.c.l.b16 %v378
        %v412 = vunpack.c.l.b16 %v379
        %v413 = vunpack.c.l.b16 %v380
        %v414 = vunpack.c.l.b16 %v381
        %v415 = vunpack.c.l.b16 %v382
        %v416 = vunpack.c.l.b16 %v383
        %v417 = vunpack.c.l.b16 %v384
        %v418 = vunpack.c.l.b16 %v385
        %v419 = vpack.c.b16 %v404, %v403
        %v420 = vpack.c.b16 %v406, %v405
        %v421 = vpack.c.b16 %v408, %v407
        %v422 = vpack.c.b16 %v410, %v409
        %v423 = vpack.c.b16 %v412, %v411
        %v424 = vpack.c.b16 %v414, %v413
        %v425 = vpack.c.b16 %v416, %v415
        %v426 = vpack.c.b16 %v418, %v417
        %435 = vmatprep.subr.bf16.mxu0 0
        %436 = vmatpush1.bf16.msra.mxu0 %v419
        %437 = vmatprep.subr.bf16.mxu0 0
        %438 = vmatpush1.bf16.msra.mxu0 %v420
        %439 = vmatprep.subr.bf16.mxu0 0
        %440 = vmatpush1.bf16.msra.mxu0 %v421
        %441 = vmatprep.subr.bf16.mxu0 0
        %442 = vmatpush1.bf16.msra.mxu0 %v422
        %443 = vmatprep.subr.bf16.mxu0 0
        %444 = vmatpush1.bf16.msra.mxu0 %v423
        %445 = vmatprep.subr.bf16.mxu0 0
        %446 = vmatpush1.bf16.msra.mxu0 %v424
        %447 = vmatprep.subr.bf16.mxu0 0
        %448 = vmatpush1.bf16.msra.mxu0 %v425
        %449 = vmatprep.subr.bf16.mxu0 0
        %450 = vmatpush1.bf16.msra.mxu0 %v426
        %451 = vmatprep.subr.bf16.mxu0 0
        %452 = vmatpush1.bf16.msra.mxu0 0
        %453 = vmatprep.subr.bf16.mxu0 0
        %454 = vmatpush1.bf16.msra.mxu0 0
        %455 = vmatprep.subr.bf16.mxu0 0
        %456 = vmatpush1.bf16.msra.mxu0 0
        %457 = vmatprep.subr.bf16.mxu0 0
        %458 = vmatpush1.bf16.msra.mxu0 0
        %459 = vmatprep.subr.bf16.mxu0 0
        %460 = vmatpush1.bf16.msra.mxu0 0
        %461 = vmatprep.subr.bf16.mxu0 0
        %462 = vmatpush1.bf16.msra.mxu0 0
        %463 = vmatprep.subr.bf16.mxu0 0
        %464 = vmatpush1.bf16.msra.mxu0 0
        %465 = vmatprep.subr.bf16.mxu0 0
        %466 = vmatpush1.bf16.msra.mxu0 0
        %467 = vmatprep.mubr.bf16.mxu0 0
        %468 = vmatmul.mubr.bf16.gmra.mrb[0].mxu0 %v369
        %v469 = vpop.f32.mrb[0].mxu0
        %v470 = vadd.f32 0.0, %v469
        %v471 = vpop.f32.mrb[0].mxu0
        %v472 = vpop.f32.mrb[0].mxu0
        %v473 = vpop.f32.mrb[0].mxu0
        %474 = vdwg.mxu0
        %v475 = vadd.f32 %v386, %v470
        %476 = vst [vmem:[#allocation2] sm:$0xff] %v475
        // Predicated region
        $region69: #{tpu_custom_call.1} parent=47 // pred_check
          %p477 = pneg %p363
        $region70: #{tpu_custom_call.1} parent=47 // pred_check_branch
          %479 = sbr.rel (%p477) target = $region72
        $region71: #{tpu_custom_call.1} parent=47 // pred_region
          %v480 = vld [vmem:[#allocation2] sm:$0xff]
          %v481 = vld [vmem:[%s2] sm:$0x1]
          %v483 = vlaneseq
          %v484 = vshrl.u32 %v483, 7
          %v485 = vsub.s32 0, %v484
          %v486 = vrot.slane %v481, %v485
          %v488 = vadd.f32 %v480, %v486
          %vm489 = vcmp.ge.f32.partialorder %v488, 0.0
          %v490 = vmul.f32 %v488, 0.01
          %v491 = vsel %vm489, %v488, %v490
          %v492 = vld [vmem:[#allocation8] sm:$0xf]
          %v493 = vld [vmem:[#allocation8 + $0x4] sm:$0xf]
          %v494 = vld [vmem:[#allocation8 + $0x8] sm:$0xf]
          %v495 = vld [vmem:[#allocation8 + $0xc] sm:$0xf]
          %v496 = vld [vmem:[#allocation8 + $0x10] sm:$0xf]
          %v497 = vld [vmem:[#allocation8 + $0x14] sm:$0xf]
          %v498 = vld [vmem:[#allocation8 + $0x18] sm:$0xf]
          %v499 = vld [vmem:[#allocation8 + $0x1c] sm:$0xf]
          %v500 = vld [vmem:[#allocation8 + $0x20] sm:$0xf]
          %v501 = vld [vmem:[#allocation8 + $0x24] sm:$0xf]
          %v502 = vld [vmem:[#allocation8 + $0x28] sm:$0xf]
          %v503 = vld [vmem:[#allocation8 + $0x2c] sm:$0xf]
          %v504 = vld [vmem:[#allocation8 + $0x30] sm:$0xf]
          %v505 = vld [vmem:[#allocation8 + $0x34] sm:$0xf]
          %v506 = vld [vmem:[#allocation8 + $0x38] sm:$0xf]
          %v507 = vld [vmem:[#allocation8 + $0x3c] sm:$0xf]
          %v508 = vld [vmem:[%s4] sm:$0x1]
          %v509 = vpack.c.bf16 %v491, %v491
          %v511 = vlaneseq
          %v512 = vshrl.u32 %v511, 7
          %v513 = vsub.s32 0, %v512
          %v514 = vrot.slane %v508, %v513
          %v532 = vunpack.c.l.b16 %v492
          %v533 = vunpack.c.l.b16 %v493
          %v534 = vunpack.c.l.b16 %v494
          %v535 = vunpack.c.l.b16 %v495
          %v536 = vunpack.c.l.b16 %v496
          %v537 = vunpack.c.l.b16 %v497
          %v538 = vunpack.c.l.b16 %v498
          %v539 = vunpack.c.l.b16 %v499
          %v540 = vunpack.c.l.b16 %v500
          %v541 = vunpack.c.l.b16 %v501
          %v542 = vunpack.c.l.b16 %v502
          %v543 = vunpack.c.l.b16 %v503
          %v544 = vunpack.c.l.b16 %v504
          %v545 = vunpack.c.l.b16 %v505
          %v546 = vunpack.c.l.b16 %v506
          %v547 = vunpack.c.l.b16 %v507
          %v548 = vpack.c.b16 %v533, %v532
          %v549 = vpack.c.b16 %v535, %v534
          %v550 = vpack.c.b16 %v537, %v536
          %v551 = vpack.c.b16 %v539, %v538
          %v552 = vpack.c.b16 %v541, %v540
          %v553 = vpack.c.b16 %v543, %v542
          %v554 = vpack.c.b16 %v545, %v544
          %v555 = vpack.c.b16 %v547, %v546
          %564 = vmatprep.subr.bf16.mxu0 0
          %565 = vmatpush1.bf16.msra.mxu0 %v548
          %566 = vmatprep.subr.bf16.mxu0 0
          %567 = vmatpush1.bf16.msra.mxu0 %v549
          %568 = vmatprep.subr.bf16.mxu0 0
          %569 = vmatpush1.bf16.msra.mxu0 %v550
          %570 = vmatprep.subr.bf16.mxu0 0
          %571 = vmatpush1.bf16.msra.mxu0 %v551
          %572 = vmatprep.subr.bf16.mxu0 0
          %573 = vmatpush1.bf16.msra.mxu0 %v552
          %574 = vmatprep.subr.bf16.mxu0 0
          %575 = vmatpush1.bf16.msra.mxu0 %v553
          %576 = vmatprep.subr.bf16.mxu0 0
          %577 = vmatpush1.bf16.msra.mxu0 %v554
          %578 = vmatprep.subr.bf16.mxu0 0
          %579 = vmatpush1.bf16.msra.mxu0 %v555
          %580 = vmatprep.subr.bf16.mxu0 0
          %581 = vmatpush1.bf16.msra.mxu0 0
          %582 = vmatprep.subr.bf16.mxu0 0
          %583 = vmatpush1.bf16.msra.mxu0 0
          %584 = vmatprep.subr.bf16.mxu0 0
          %585 = vmatpush1.bf16.msra.mxu0 0
          %586 = vmatprep.subr.bf16.mxu0 0
          %587 = vmatpush1.bf16.msra.mxu0 0
          %588 = vmatprep.subr.bf16.mxu0 0
          %589 = vmatpush1.bf16.msra.mxu0 0
          %590 = vmatprep.subr.bf16.mxu0 0
          %591 = vmatpush1.bf16.msra.mxu0 0
          %592 = vmatprep.subr.bf16.mxu0 0
          %593 = vmatpush1.bf16.msra.mxu0 0
          %594 = vmatprep.subr.bf16.mxu0 0
          %595 = vmatpush1.bf16.msra.mxu0 0
          %596 = vmatprep.mubr.bf16.mxu0 0
          %597 = vmatmul.mubr.bf16.gmra.mrb[0].mxu0 %v509
          %v598 = vpop.f32.mrb[0].mxu0
          %v599 = vadd.f32 %v514, %v598
          %v600 = vpop.f32.mrb[0].mxu0
          %v601 = vpop.f32.mrb[0].mxu0
          %v602 = vpop.f32.mrb[0].mxu0
          %603 = vdwg.mxu0
          %vm604 = vcmp.ge.f32.partialorder %v599, 0.0
          %v605 = vmul.f32 %v599, 0.01
          %v606 = vsel %vm604, %v599, %v605
          %v607 = vld [vmem:[#allocation9] sm:$0xf]
          %v608 = vld [vmem:[#allocation9 + $0x4] sm:$0xf]
          %v609 = vld [vmem:[#allocation9 + $0x8] sm:$0xf]
          %v610 = vld [vmem:[#allocation9 + $0xc] sm:$0xf]
          %v611 = vld [vmem:[#allocation9 + $0x10] sm:$0xf]
          %v612 = vld [vmem:[#allocation9 + $0x14] sm:$0xf]
          %v613 = vld [vmem:[#allocation9 + $0x18] sm:$0xf]
          %v614 = vld [vmem:[#allocation9 + $0x1c] sm:$0xf]
          %v615 = vld [vmem:[#allocation9 + $0x20] sm:$0xf]
          %v616 = vld [vmem:[#allocation9 + $0x24] sm:$0xf]
          %v617 = vld [vmem:[#allocation9 + $0x28] sm:$0xf]
          %v618 = vld [vmem:[#allocation9 + $0x2c] sm:$0xf]
          %v619 = vld [vmem:[#allocation9 + $0x30] sm:$0xf]
          %v620 = vld [vmem:[#allocation9 + $0x34] sm:$0xf]
          %v621 = vld [vmem:[#allocation9 + $0x38] sm:$0xf]
          %v622 = vld [vmem:[#allocation9 + $0x3c] sm:$0xf]
          %v623 = vld [vmem:[%s6] sm:$0x1]
          %v624 = vpack.c.bf16 %v606, %v606
          %v626 = vlaneseq
          %v627 = vshrl.u32 %v626, 7
          %v628 = vsub.s32 0, %v627
          %v629 = vrot.slane %v623, %v628
          %v647 = vunpack.c.l.b16 %v607
          %v648 = vunpack.c.l.b16 %v608
          %v649 = vunpack.c.l.b16 %v609
          %v650 = vunpack.c.l.b16 %v610
          %v651 = vunpack.c.l.b16 %v611
          %v652 = vunpack.c.l.b16 %v612
          %v653 = vunpack.c.l.b16 %v613
          %v654 = vunpack.c.l.b16 %v614
          %v655 = vunpack.c.l.b16 %v615
          %v656 = vunpack.c.l.b16 %v616
          %v657 = vunpack.c.l.b16 %v617
          %v658 = vunpack.c.l.b16 %v618
          %v659 = vunpack.c.l.b16 %v619
          %v660 = vunpack.c.l.b16 %v620
          %v661 = vunpack.c.l.b16 %v621
          %v662 = vunpack.c.l.b16 %v622
          %v663 = vpack.c.b16 %v648, %v647
          %v664 = vpack.c.b16 %v650, %v649
          %v665 = vpack.c.b16 %v652, %v651
          %v666 = vpack.c.b16 %v654, %v653
          %v667 = vpack.c.b16 %v656, %v655
          %v668 = vpack.c.b16 %v658, %v657
          %v669 = vpack.c.b16 %v660, %v659
          %v670 = vpack.c.b16 %v662, %v661
          %679 = vmatprep.subr.bf16.mxu0 0
          %680 = vmatpush1.bf16.msra.mxu0 %v663
          %681 = vmatprep.subr.bf16.mxu0 0
          %682 = vmatpush1.bf16.msra.mxu0 %v664
          %683 = vmatprep.subr.bf16.mxu0 0
          %684 = vmatpush1.bf16.msra.mxu0 %v665
          %685 = vmatprep.subr.bf16.mxu0 0
          %686 = vmatpush1.bf16.msra.mxu0 %v666
          %687 = vmatprep.subr.bf16.mxu0 0
          %688 = vmatpush1.bf16.msra.mxu0 %v667
          %689 = vmatprep.subr.bf16.mxu0 0
          %690 = vmatpush1.bf16.msra.mxu0 %v668
          %691 = vmatprep.subr.bf16.mxu0 0
          %692 = vmatpush1.bf16.msra.mxu0 %v669
          %693 = vmatprep.subr.bf16.mxu0 0
          %694 = vmatpush1.bf16.msra.mxu0 %v670
          %695 = vmatprep.subr.bf16.mxu0 0
          %696 = vmatpush1.bf16.msra.mxu0 0
          %697 = vmatprep.subr.bf16.mxu0 0
          %698 = vmatpush1.bf16.msra.mxu0 0
          %699 = vmatprep.subr.bf16.mxu0 0
          %700 = vmatpush1.bf16.msra.mxu0 0
          %701 = vmatprep.subr.bf16.mxu0 0
          %702 = vmatpush1.bf16.msra.mxu0 0
          %703 = vmatprep.subr.bf16.mxu0 0
          %704 = vmatpush1.bf16.msra.mxu0 0
          %705 = vmatprep.subr.bf16.mxu0 0
          %706 = vmatpush1.bf16.msra.mxu0 0
          %707 = vmatprep.subr.bf16.mxu0 0
          %708 = vmatpush1.bf16.msra.mxu0 0
          %709 = vmatprep.subr.bf16.mxu0 0
          %710 = vmatpush1.bf16.msra.mxu0 0
          %711 = vmatprep.mubr.bf16.mxu0 0
          %712 = vmatmul.mubr.bf16.gmra.mrb[0].mxu0 %v624
          %v713 = vpop.f32.mrb[0].mxu0
          %v714 = vadd.f32 %v629, %v713
          %v715 = vpop.f32.mrb[0].mxu0
          %v716 = vpop.f32.mrb[0].mxu0
          %v717 = vpop.f32.mrb[0].mxu0
          %718 = vdwg.mxu0
          %v719 = vsub.f32 0.0, %v714
          %v720 = vmul.f32 %v719, 1.442695
          %v721 = vpow.pop %v720
          %v722 = vadd.f32 %v721, 1.0
          %v723 = vrcp.pop %v722
          %724 = vst [vmem:[%s360] sm:$0xff] %v723
        $region72: #{tpu_custom_call.1} parent=47 // pred_fallthru
          _
        %s725 = sand.u32 %s205, 1
        %s726 = scalar_lea.sflag [#allocation5], %s725
        %s727 = sand.u32 %s205, 1
        %s728 = smul.addr %s727, 8
        %s729 = scalar_lea.vmem [#allocation11], %s728
        // Predicated region
        $region73: #{tpu_custom_call.1} parent=47 // pred_check
          %p730 = pneg %p215
        $region74: #{tpu_custom_call.1} parent=47 // pred_check_branch
          %732 = sbr.rel (%p730) target = $region76
        $region75: #{tpu_custom_call.1} parent=47 // pred_region
          %s734 = ssub.s32 128, 128
          %735 = vsyncadd %s726, %s734
          %s736 = smul.addr %s30, 128
          %s737 = scalar_lea.hbm %s7, %s736
          %s739 = sshll.u32 %s729, 4
          %s740 = int_to_ptr.vmem [resolvable:$true] %s739
          %742 = dma.vmem_to_hbm [thread:$0]  %s740, 128, %s737, %s726
        $region76: #{tpu_custom_call.1} parent=47 // pred_fallthru
          _
      $region48: #{tpu_custom_call.1} parent=5 // pred_fallthru
        _
      %p743 = scmp.le.s32.totalorder 2, %s21
      // Predicated region
      $region77: #{tpu_custom_call.1} parent=5 // pred_check
        %p744 = pneg %p743
      $region78: #{tpu_custom_call.1} parent=5 // pred_check_branch
        %746 = sbr.rel (%p744) target = $region80
      $region79: #{tpu_custom_call.1} parent=5 // pred_region
        %s747 = ssub.s32 %s21, 2
        // Predicated region
        $region81: #{tpu_custom_call.1} parent=79 // pred_check
          %p748 = pneg %p221
        $region82: #{tpu_custom_call.1} parent=79 // pred_check_branch
          %750 = sbr.rel (%p748) target = $region84
        $region83: #{tpu_custom_call.1} parent=79 // pred_region
          %s751 = sand.u32 %s206, 1
          %s752 = scalar_lea.sflag [#allocation5], %s751
          %s753 = sand.u32 %s206, 1
          %s754 = smul.addr %s753, 8
          %s755 = scalar_lea.vmem [#allocation11], %s754
          %756 = dma.done %s752, 128
        $region84: #{tpu_custom_call.1} parent=79 // pred_fallthru
          _
      $region80: #{tpu_custom_call.1} parent=5 // pred_fallthru
        _
    $region6: #{tpu_custom_call.1} parent=1 // loop_footer
      %s25 = sadd.s32 1, %s21
    $region7: #{tpu_custom_call.1} parent=1 // loop_footer_branch
      %20 = sbr.rel target = $region3
    $region8: #{tpu_custom_call.1} parent=1 // loop_exit
      _
    %757 = vsyncpa [#allocation4], 1
    %s758 = scalar_lea.sflag [#allocation4], 1
    %759 = vsyncpa %s758, 1
    %760 = vsyncpa [#allocation7], 1
    %761 = vsyncpa [#allocation10], 1
    %762 = vsyncpa [#allocation5], 1
    %s763 = scalar_lea.sflag [#allocation5], 1
    %764 = vsyncpa %s763, 1

// kernel: tpu_custom_call.1
$region0: #{tpu_custom_call.1}
  #allocation0 [shape = 'u32[]', space=smem, size = 0x4, offset = 0x4, fixed_abs, tag = 'smem constant byte address 0x4 - core index']
  #allocation1 [shape = 'u32[144,128]{1,0:T(1,128)}', space=vmem, size = 0x12000, scoped, tag = 'internal scratch']
  #allocation2 [shape = 'f32[8,128]{1,0:T(8,128)}', space=vmem, size = 0x1000, scoped, tag = 'scratch operand']
  %s0 = inlined_call_operand.hbm [shape: f32[16,128], index: 0, kind: input, shape index: {}]
  %s1 = inlined_call_operand.hbm [shape: bf16[128,128], index: 1, kind: input, shape index: {}]
  %s2 = inlined_call_operand.vmem [shape: f32[1,128], index: 2, kind: input, shape index: {}]
  %s3 = inlined_call_operand.hbm [shape: bf16[128,128], index: 3, kind: input, shape index: {}]
  %s4 = inlined_call_operand.vmem [shape: f32[1,128], index: 4, kind: input, shape index: {}]
  %s5 = inlined_call_operand.hbm [shape: bf16[128,128], index: 5, kind: input, shape index: {}]
  %s6 = inlined_call_operand.vmem [shape: f32[1,128], index: 6, kind: input, shape index: {}]
  %s7 = inlined_call_operand.hbm [shape: f32[16,128], index: 7, kind: output, shape index: {}]
  %s8 = sld [smem:[#allocation0]]
  $region85: #{tpu_custom_call.1} parent=0
    _
  %s10 = ssub.s32 1, %s8
  %s11 = scalar_select 0, %s10, %s8
  $region1: #{tpu_custom_call.1} parent=0
    #allocation3 [shape = 'u8[8192]{0}', space=vmem, size = 0x2000, scoped, tag = 'input window, operand 0']
    #allocation4 [shape = 's32[2]{0}', space=sflag, size = 0x8, scoped, tag = 'scoped memory for tpu_custom_call.1']
    #allocation5 [shape = 's32[2]{0}', space=sflag, size = 0x8, scoped, tag = 'scoped memory for tpu_custom_call.1']
    #allocation6 [shape = 'u8[32768]{0}', space=vmem, size = 0x8000, scoped, tag = 'input window, operand 1, single buffered']
    #allocation7 [shape = 's32[1]{0}', space=sflag, size = 0x4, scoped, tag = 'scoped memory for tpu_custom_call.1']
    #allocation8 [shape = 'u8[32768]{0}', space=vmem, size = 0x8000, scoped, tag = 'input window, operand 3, single buffered']
    #allocation9 [shape = 'u8[32768]{0}', space=vmem, size = 0x8000, scoped, tag = 'input window, operand 5, single buffered']
    #allocation10 [shape = 's32[1]{0}', space=sflag, size = 0x4, scoped, tag = 'scoped memory for tpu_custom_call.1']
    #allocation11 [shape = 'u8[8192]{0}', space=vmem, size = 0x2000, scoped, tag = 'output window, operand 0']
    %12 = vsyncpa [#allocation4], 0
    %s13 = scalar_lea.sflag [#allocation4], 1
    %14 = vsyncpa %s13, 0
    %15 = vsyncpa [#allocation7], 0
    %16 = vsyncpa [#allocation10], 0
    %17 = vsyncpa [#allocation5], 0
    %s18 = scalar_lea.sflag [#allocation5], 1
    %19 = vsyncpa %s18, 0
    loop: start=0, step=1, limit=4
    $region2: #{tpu_custom_call.1} parent=1 // loop_pre_header
      _
    $region3: #{tpu_custom_call.1} parent=1 // loop_header
      %s21 = sphi 0, %s25
      %p22 = scmp.ge.s32.totalorder %s21, 4
      %s28 = sphi 0, %s40
      %s29 = sphi 0, %s36
      %s30 = sphi 0, %s28
      %s31 = sphi 0, %s29
      %s32 = sphi 0, %s30
      %s33 = sphi 0, %s31
      %s45 = sphi 0, %s47
      %s48 = sphi 0, %s45
      %s49 = sphi 0, %s48
      %s65 = sphi 0, %s49
      %s71 = sphi 0, %s73
      %s74 = sphi 0, %s71
      %s75 = sphi 0, %s74
      %s91 = sphi 0, %s75
      %s95 = sphi 0, %s95
      %s97 = sphi 0, %s95
      %s98 = sphi 0, %s97
      %s112 = sphi 0, %s98
      %s116 = sphi 0, %s116
      %s118 = sphi 0, %s116
      %s119 = sphi 0, %s118
      %s133 = sphi 0, %s119
      %s137 = sphi 0, %s137
      %s139 = sphi 0, %s137
      %s140 = sphi 0, %s139
      %s154 = sphi 0, %s140
      %s158 = sphi 0, %s158
      %s160 = sphi 0, %s158
      %s161 = sphi 0, %s160
      %s175 = sphi 0, %s161
      %s179 = sphi 0, %s179
      %s181 = sphi 0, %s179
      %s182 = sphi 0, %s181
      %s196 = sphi 0, %s182
      %s202 = sphi 0, %s204
      %s205 = sphi 0, %s202
      %s206 = sphi 0, %s205
      %s222 = sphi 0, %s206
    $region4: #{tpu_custom_call.1} parent=1 // loop_header_branch
      %24 = sbr.rel (%p22) target = $region8
    $region5: #{tpu_custom_call.1} parent=1 // loop_body
      %s26 = ssub.s32 %s21, 1
      %s27 = ssub.s32 %s21, 2
      %s34 = sadd.s32 1, %s29
      %p35 = scmp.ge.s32.totalorder %s34, 1
      %s36 = scalar_select %p35, 0, %s34
      %s37 = sadd.s32 1, %s28
      %s38 = scalar_select %p35, %s37, %s28
      %p39 = scmp.ge.s32.totalorder %s38, 2
      %s40 = scalar_select %p39, 0, %s38
      %s41 = ssub.s32 %s28, %s40
      %s42 = ssub.s32 %s29, %s36
      %s43 = sor.u32 %s41, %s42
      %p44 = scmp.eq.s32.totalorder %s43, 0
      %s46 = sadd.s32 %s45, 1
      %s47 = scalar_select %p44, %s45, %s46
      %p50 = pneg %p44
      %p51 = scmp.eq.s32.totalorder %s21, 1
      %p52 = por %p50, %p51
      %p53 = scmp.ne.s32.totalorder %s45, %s48
      %p54 = scmp.eq.s32.totalorder %s21, 0
      %p55 = por %p53, %p54
      %p56 = scmp.ne.s32.totalorder %s45, %s48
      %p57 = scmp.eq.s32.totalorder %s26, 1
      %p58 = por %p56, %p57
      %p59 = scmp.ne.s32.totalorder %s48, %s49
      %p60 = scmp.eq.s32.totalorder %s26, 0
      %p61 = por %p59, %p60
      %p62 = scmp.ne.s32.totalorder %s48, %s49
      %p63 = scmp.eq.s32.totalorder %s27, 1
      %p64 = por %p62, %p63
      %p66 = scmp.ne.s32.totalorder %s49, %s65
      %p67 = scmp.eq.s32.totalorder %s27, 0
      %p68 = por %p66, %p67
      %s69 = ssub.s32 %s29, %s36
      %p70 = scmp.eq.s32.totalorder %s69, 0
      %s72 = sadd.s32 %s71, 1
      %s73 = scalar_select %p70, %s71, %s72
      %p76 = pneg %p70
      %p77 = scmp.eq.s32.totalorder %s21, 1
      %p78 = por %p76, %p77
      %p79 = scmp.ne.s32.totalorder %s71, %s74
      %p80 = scmp.eq.s32.totalorder %s21, 0
      %p81 = por %p79, %p80
      %p82 = scmp.ne.s32.totalorder %s71, %s74
      %p83 = scmp.eq.s32.totalorder %s26, 1
      %p84 = por %p82, %p83
      %p85 = scmp.ne.s32.totalorder %s74, %s75
      %p86 = scmp.eq.s32.totalorder %s26, 0
      %p87 = por %p85, %p86
      %p88 = scmp.ne.s32.totalorder %s74, %s75
      %p89 = scmp.eq.s32.totalorder %s27, 1
      %p90 = por %p88, %p89
      %p92 = scmp.ne.s32.totalorder %s75, %s91
      %p93 = scmp.eq.s32.totalorder %s27, 0
      %p94 = por %p92, %p93
      %s96 = sadd.s32 %s95, 1
      %p99 = scmp.eq.s32.totalorder %s21, 1
      %p100 = scmp.ne.s32.totalorder %s95, %s97
      %p101 = scmp.eq.s32.totalorder %s21, 0
      %p102 = por %p100, %p101
      %p103 = scmp.ne.s32.totalorder %s95, %s97
      %p104 = scmp.eq.s32.totalorder %s26, 1
      %p105 = por %p103, %p104
      %p106 = scmp.ne.s32.totalorder %s97, %s98
      %p107 = scmp.eq.s32.totalorder %s26, 0
      %p108 = por %p106, %p107
      %p109 = scmp.ne.s32.totalorder %s97, %s98
      %p110 = scmp.eq.s32.totalorder %s27, 1
      %p111 = por %p109, %p110
      %p113 = scmp.ne.s32.totalorder %s98, %s112
      %p114 = scmp.eq.s32.totalorder %s27, 0
      %p115 = por %p113, %p114
      %s117 = sadd.s32 %s116, 1
      %p120 = scmp.eq.s32.totalorder %s21, 1
      %p121 = scmp.ne.s32.totalorder %s116, %s118
      %p122 = scmp.eq.s32.totalorder %s21, 0
      %p123 = por %p121, %p122
      %p124 = scmp.ne.s32.totalorder %s116, %s118
      %p125 = scmp.eq.s32.totalorder %s26, 1
      %p126 = por %p124, %p125
      %p127 = scmp.ne.s32.totalorder %s118, %s119
      %p128 = scmp.eq.s32.totalorder %s26, 0
      %p129 = por %p127, %p128
      %p130 = scmp.ne.s32.totalorder %s118, %s119
      %p131 = scmp.eq.s32.totalorder %s27, 1
      %p132 = por %p130, %p131
      %p134 = scmp.ne.s32.totalorder %s119, %s133
      %p135 = scmp.eq.s32.totalorder %s27, 0
      %p136 = por %p134, %p135
      %s138 = sadd.s32 %s137, 1
      %p141 = scmp.eq.s32.totalorder %s21, 1
      %p142 = scmp.ne.s32.totalorder %s137, %s139
      %p143 = scmp.eq.s32.totalorder %s21, 0
      %p144 = por %p142, %p143
      %p145 = scmp.ne.s32.totalorder %s137, %s139
      %p146 = scmp.eq.s32.totalorder %s26, 1
      %p147 = por %p145, %p146
      %p148 = scmp.ne.s32.totalorder %s139, %s140
      %p149 = scmp.eq.s32.totalorder %s26, 0
      %p150 = por %p148, %p149
      %p151 = scmp.ne.s32.totalorder %s139, %s140
      %p152 = scmp.eq.s32.totalorder %s27, 1
      %p153 = por %p151, %p152
      %p155 = scmp.ne.s32.totalorder %s140, %s154
      %p156 = scmp.eq.s32.totalorder %s27, 0
      %p157 = por %p155, %p156
      %s159 = sadd.s32 %s158, 1
      %p162 = scmp.eq.s32.totalorder %s21, 1
      %p163 = scmp.ne.s32.totalorder %s158, %s160
      %p164 = scmp.eq.s32.totalorder %s21, 0
      %p165 = por %p163, %p164
      %p166 = scmp.ne.s32.totalorder %s158, %s160
      %p167 = scmp.eq.s32.totalorder %s26, 1
      %p168 = por %p166, %p167
      %p169 = scmp.ne.s32.totalorder %s160, %s161
      %p170 = scmp.eq.s32.totalorder %s26, 0
      %p171 = por %p169, %p170
      %p172 = scmp.ne.s32.totalorder %s160, %s161
      %p173 = scmp.eq.s32.totalorder %s27, 1
      %p174 = por %p172, %p173
      %p176 = scmp.ne.s32.totalorder %s161, %s175
      %p177 = scmp.eq.s32.totalorder %s27, 0
      %p178 = por %p176, %p177
      %s180 = sadd.s32 %s179, 1
      %p183 = scmp.eq.s32.totalorder %s21, 1
      %p184 = scmp.ne.s32.totalorder %s179, %s181
      %p185 = scmp.eq.s32.totalorder %s21, 0
      %p186 = por %p184, %p185
      %p187 = scmp.ne.s32.totalorder %s179, %s181
      %p188 = scmp.eq.s32.totalorder %s26, 1
      %p189 = por %p187, %p188
      %p190 = scmp.ne.s32.totalorder %s181, %s182
      %p191 = scmp.eq.s32.totalorder %s26, 0
      %p192 = por %p190, %p191
      %p193 = scmp.ne.s32.totalorder %s181, %s182
      %p194 = scmp.eq.s32.totalorder %s27, 1
      %p195 = por %p193, %p194
      %p197 = scmp.ne.s32.totalorder %s182, %s196
      %p198 = scmp.eq.s32.totalorder %s27, 0
      %p199 = por %p197, %p198
      %s200 = ssub.s32 %s28, %s40
      %p201 = scmp.eq.s32.totalorder %s200, 0
      %s203 = sadd.s32 %s202, 1
      %s204 = scalar_select %p201, %s202, %s203
      %p207 = pneg %p201
      %p208 = scmp.eq.s32.totalorder %s21, 1
      %p209 = por %p207, %p208
      %p210 = scmp.ne.s32.totalorder %s202, %s205
      %p211 = scmp.eq.s32.totalorder %s21, 0
      %p212 = por %p210, %p211
      %p213 = scmp.ne.s32.totalorder %s202, %s205
      %p214 = scmp.eq.s32.totalorder %s26, 1
      %p215 = por %p213, %p214
      %p216 = scmp.ne.s32.totalorder %s205, %s206
      %p217 = scmp.eq.s32.totalorder %s26, 0
      %p218 = por %p216, %p217
      %p219 = scmp.ne.s32.totalorder %s205, %s206
      %p220 = scmp.eq.s32.totalorder %s27, 1
      %p221 = por %p219, %p220
      %p223 = scmp.ne.s32.totalorder %s206, %s222
      %p224 = scmp.eq.s32.totalorder %s27, 0
      %p225 = por %p223, %p224
      %p226 = scmp.le.s32.totalorder 1, %s21
      %p227 = scmp.lt.s32.totalorder %s21, 3
      %p228 = pnand %p226, %p227
      %p229 = pneg %p228
      // Predicated region
      $region9: #{tpu_custom_call.1} parent=5 // pred_check
        _
      $region10: #{tpu_custom_call.1} parent=5 // pred_check_branch
        %231 = sbr.rel (%p228) target = $region12
      $region11: #{tpu_custom_call.1} parent=5 // pred_region
        %s232 = ssub.s32 %s21, 1
        // Predicated region
        $region13: #{tpu_custom_call.1} parent=11 // pred_check
          %p233 = pneg %p87
        $region14: #{tpu_custom_call.1} parent=11 // pred_check_branch
          %235 = sbr.rel (%p233) target = $region16
        $region15: #{tpu_custom_call.1} parent=11 // pred_region
          %s236 = smul.u32 16, %s31
          %s238 = ssub.s32 1024, 1024
          %239 = vsyncadd [#allocation7], %s238
          %s240 = smul.addr %s236, 64
          %s241 = scalar_lea.hbm %s1, %s240
          %s242 = sshll.u32 [#allocation6], 4
          %s243 = int_to_ptr.vmem [resolvable:$true] %s242
          %248 = dma.hbm_to_vmem [thread:$0]  %s241, 1024, %s243, [#allocation7], 64, 64, 4
        $region16: #{tpu_custom_call.1} parent=11 // pred_fallthru
          _
        // Predicated region
        $region17: #{tpu_custom_call.1} parent=11 // pred_check
          %p249 = pneg %p108
        $region18: #{tpu_custom_call.1} parent=11 // pred_check_branch
          %251 = sbr.rel (%p249) target = $region20
        $region19: #{tpu_custom_call.1} parent=11 // pred_region
          _
        $region20: #{tpu_custom_call.1} parent=11 // pred_fallthru
          _
        // Predicated region
        $region21: #{tpu_custom_call.1} parent=11 // pred_check
          %p252 = pneg %p129
        $region22: #{tpu_custom_call.1} parent=11 // pred_check_branch
          %254 = sbr.rel (%p252) target = $region24
        $region23: #{tpu_custom_call.1} parent=11 // pred_region
          %s256 = ssub.s32 1024, 1024
          %257 = vsyncadd [#allocation7], %s256
          %s258 = sshll.u32 [#allocation8], 4
          %s259 = int_to_ptr.vmem [resolvable:$true] %s258
          %264 = dma.hbm_to_vmem [thread:$0]  %s3, 1024, %s259, [#allocation7], 64, 64, 4
        $region24: #{tpu_custom_call.1} parent=11 // pred_fallthru
          _
        // Predicated region
        $region25: #{tpu_custom_call.1} parent=11 // pred_check
          %p265 = pneg %p150
        $region26: #{tpu_custom_call.1} parent=11 // pred_check_branch
          %267 = sbr.rel (%p265) target = $region28
        $region27: #{tpu_custom_call.1} parent=11 // pred_region
          _
        $region28: #{tpu_custom_call.1} parent=11 // pred_fallthru
          _
        // Predicated region
        $region29: #{tpu_custom_call.1} parent=11 // pred_check
          %p268 = pneg %p171
        $region30: #{tpu_custom_call.1} parent=11 // pred_check_branch
          %270 = sbr.rel (%p268) target = $region32
        $region31: #{tpu_custom_call.1} parent=11 // pred_region
          %s272 = ssub.s32 1024, 1024
          %273 = vsyncadd [#allocation10], %s272
          %s274 = sshll.u32 [#allocation9], 4
          %s275 = int_to_ptr.vmem [resolvable:$true] %s274
          %280 = dma.hbm_to_vmem [thread:$0]  %s5, 1024, %s275, [#allocation10], 64, 64, 4
        $region32: #{tpu_custom_call.1} parent=11 // pred_fallthru
          _
        // Predicated region
        $region33: #{tpu_custom_call.1} parent=11 // pred_check
          %p281 = pneg %p192
        $region34: #{tpu_custom_call.1} parent=11 // pred_check_branch
          %283 = sbr.rel (%p281) target = $region36
        $region35: #{tpu_custom_call.1} parent=11 // pred_region
          _
        $region36: #{tpu_custom_call.1} parent=11 // pred_fallthru
          _
      $region12: #{tpu_custom_call.1} parent=5 // pred_fallthru
        _
      %p284 = scmp.lt.s32.totalorder %s21, 2
      // Predicated region
      $region37: #{tpu_custom_call.1} parent=5 // pred_check
        %p285 = pneg %p284
      $region38: #{tpu_custom_call.1} parent=5 // pred_check_branch
        %287 = sbr.rel (%p285) target = $region40
      $region39: #{tpu_custom_call.1} parent=5 // pred_region
        // Predicated region
        $region41: #{tpu_custom_call.1} parent=39 // pred_check
          %p288 = pneg %p55
        $region42: #{tpu_custom_call.1} parent=39 // pred_check_branch
          %290 = sbr.rel (%p288) target = $region44
        $region43: #{tpu_custom_call.1} parent=39 // pred_region
          %s291 = sand.u32 %s45, 1
          %s292 = scalar_lea.sflag [#allocation4], %s291
          %s293 = sand.u32 %s45, 1
          %s294 = smul.addr %s293, 8
          %s295 = scalar_lea.vmem [#allocation3], %s294
          %s297 = ssub.s32 128, 128
          %298 = vsyncadd %s292, %s297
          %s299 = sadd.s32 %s29, %s28
          %s300 = smul.addr %s299, 128
          %s301 = scalar_lea.hbm %s0, %s300
          %s303 = sshll.u32 %s295, 4
          %s304 = int_to_ptr.vmem [resolvable:$true] %s303
          %306 = dma.hbm_to_vmem [thread:$0]  %s301, 128, %s304, %s292
        $region44: #{tpu_custom_call.1} parent=39 // pred_fallthru
          _
      $region40: #{tpu_custom_call.1} parent=5 // pred_fallthru
        _
      %p307 = scmp.le.s32.totalorder 1, %s21
      %p308 = scmp.lt.s32.totalorder %s21, 3
      %p309 = pnand %p307, %p308
      %p310 = pneg %p309
      // Predicated region
      $region45: #{tpu_custom_call.1} parent=5 // pred_check
        _
      $region46: #{tpu_custom_call.1} parent=5 // pred_check_branch
        %312 = sbr.rel (%p309) target = $region48
      $region47: #{tpu_custom_call.1} parent=5 // pred_region
        %s313 = ssub.s32 %s21, 1
        %s314 = sand.u32 %s48, 1
        %s315 = scalar_lea.sflag [#allocation4], %s314
        %s316 = sand.u32 %s48, 1
        %s317 = smul.addr %s316, 8
        %s318 = scalar_lea.vmem [#allocation3], %s317
        // Predicated region
        $region49: #{tpu_custom_call.1} parent=47 // pred_check
          %p319 = pneg %p61
        $region50: #{tpu_custom_call.1} parent=47 // pred_check_branch
          %321 = sbr.rel (%p319) target = $region52
        $region51: #{tpu_custom_call.1} parent=47 // pred_region
          %322 = dma.done %s315, 128
        $region52: #{tpu_custom_call.1} parent=47 // pred_fallthru
          _
        // Predicated region
        $region53: #{tpu_custom_call.1} parent=47 // pred_check
          %p323 = pneg %p87
        $region54: #{tpu_custom_call.1} parent=47 // pred_check_branch
          %325 = sbr.rel (%p323) target = $region56
        $region55: #{tpu_custom_call.1} parent=47 // pred_region
          %326 = dma.done [#allocation7], 1024
        $region56: #{tpu_custom_call.1} parent=47 // pred_fallthru
          _
        // Predicated region
        $region57: #{tpu_custom_call.1} parent=47 // pred_check
          %p327 = pneg %p129
        $region58: #{tpu_custom_call.1} parent=47 // pred_check_branch
          %329 = sbr.rel (%p327) target = $region60
        $region59: #{tpu_custom_call.1} parent=47 // pred_region
          %330 = dma.done [#allocation7], 1024
        $region60: #{tpu_custom_call.1} parent=47 // pred_fallthru
          _
        // Predicated region
        $region61: #{tpu_custom_call.1} parent=47 // pred_check
          %p331 = pneg %p171
        $region62: #{tpu_custom_call.1} parent=47 // pred_check_branch
          %333 = sbr.rel (%p331) target = $region64
        $region63: #{tpu_custom_call.1} parent=47 // pred_region
          %334 = dma.done [#allocation10], 1024
        $region64: #{tpu_custom_call.1} parent=47 // pred_fallthru
          _
        %s335 = sand.u32 %s48, 1
        %s336 = scalar_lea.sflag [#allocation4], %s335
        %s337 = sand.u32 %s48, 1
        %s338 = smul.addr %s337, 8
        %s339 = scalar_lea.vmem [#allocation3], %s338
        %p340 = pneg %p61
        %p341 = pneg %p58
        %p342 = pneg %p87
        %p343 = pneg %p84
        %p344 = pneg %p108
        %p345 = pneg %p105
        %p346 = pneg %p129
        %p347 = pneg %p126
        %p348 = pneg %p150
        %p349 = pneg %p147
        %p350 = pneg %p171
        %p351 = pneg %p168
        %p352 = pneg %p192
        %p353 = pneg %p189
        %p354 = pneg %p218
        %p355 = pneg %p215
        %s356 = sand.u32 %s205, 1
        %s357 = scalar_lea.sflag [#allocation5], %s356
        %s358 = sand.u32 %s205, 1
        %s359 = smul.addr %s358, 8
        %s360 = scalar_lea.vmem [#allocation11], %s359
        %s361 = smul.u32 16, %s31
        %p363 = scmp.eq.s32.totalorder %s31, 0
        // Predicated region
        $region65: #{tpu_custom_call.1} parent=47 // pred_check
          %p364 = pneg %p363
        $region66: #{tpu_custom_call.1} parent=47 // pred_check_branch
          %366 = sbr.rel (%p364) target = $region68
        $region67: #{tpu_custom_call.1} parent=47 // pred_region
          %367 = vst [vmem:[#allocation2] sm:$0xff] 0.0
        $region68: #{tpu_custom_call.1} parent=47 // pred_fallthru
          _
        %v368 = vld [vmem:[%s318] sm:$0xff]
        %v369 = vpack.c.bf16 %v368, %v368
        %v370 = vld [vmem:[#allocation6] sm:$0xf]
        %v371 = vld [vmem:[#allocation6 + $0x4] sm:$0xf]
        %v372 = vld [vmem:[#allocation6 + $0x8] sm:$0xf]
        %v373 = vld [vmem:[#allocation6 + $0xc] sm:$0xf]
        %v374 = vld [vmem:[#allocation6 + $0x10] sm:$0xf]
        %v375 = vld [vmem:[#allocation6 + $0x14] sm:$0xf]
        %v376 = vld [vmem:[#allocation6 + $0x18] sm:$0xf]
        %v377 = vld [vmem:[#allocation6 + $0x1c] sm:$0xf]
        %v378 = vld [vmem:[#allocation6 + $0x20] sm:$0xf]
        %v379 = vld [vmem:[#allocation6 + $0x24] sm:$0xf]
        %v380 = vld [vmem:[#allocation6 + $0x28] sm:$0xf]
        %v381 = vld [vmem:[#allocation6 + $0x2c] sm:$0xf]
        %v382 = vld [vmem:[#allocation6 + $0x30] sm:$0xf]
        %v383 = vld [vmem:[#allocation6 + $0x34] sm:$0xf]
        %v384 = vld [vmem:[#allocation6 + $0x38] sm:$0xf]
        %v385 = vld [vmem:[#allocation6 + $0x3c] sm:$0xf]
        %v386 = vld [vmem:[#allocation2] sm:$0xff]
        %v403 = vunpack.c.l.b16 %v370
        %v404 = vunpack.c.l.b16 %v371
        %v405 = vunpack.c.l.b16 %v372
        %v406 = vunpack.c.l.b16 %v373
        %v407 = vunpack.c.l.b16 %v374
        %v408 = vunpack.c.l.b16 %v375
        %v409 = vunpack.c.l.b16 %v376
        %v410 = vunpack.c.l.b16 %v377
        %v411 = vunpack.c.l.b16 %v378
        %v412 = vunpack.c.l.b16 %v379
        %v413 = vunpack.c.l.b16 %v380
        %v414 = vunpack.c.l.b16 %v381
        %v415 = vunpack.c.l.b16 %v382
        %v416 = vunpack.c.l.b16 %v383
        %v417 = vunpack.c.l.b16 %v384
        %v418 = vunpack.c.l.b16 %v385
        %v419 = vpack.c.b16 %v404, %v403
        %v420 = vpack.c.b16 %v406, %v405
        %v421 = vpack.c.b16 %v408, %v407
        %v422 = vpack.c.b16 %v410, %v409
        %v423 = vpack.c.b16 %v412, %v411
        %v424 = vpack.c.b16 %v414, %v413
        %v425 = vpack.c.b16 %v416, %v415
        %v426 = vpack.c.b16 %v418, %v417
        %435 = vmatprep.subr.bf16.mxu0 0
        %436 = vmatpush1.bf16.msra.mxu0 %v419
        %437 = vmatprep.subr.bf16.mxu0 0
        %438 = vmatpush1.bf16.msra.mxu0 %v420
        %439 = vmatprep.subr.bf16.mxu0 0
        %440 = vmatpush1.bf16.msra.mxu0 %v421
        %441 = vmatprep.subr.bf16.mxu0 0
        %442 = vmatpush1.bf16.msra.mxu0 %v422
        %443 = vmatprep.subr.bf16.mxu0 0
        %444 = vmatpush1.bf16.msra.mxu0 %v423
        %445 = vmatprep.subr.bf16.mxu0 0
        %446 = vmatpush1.bf16.msra.mxu0 %v424
        %447 = vmatprep.subr.bf16.mxu0 0
        %448 = vmatpush1.bf16.msra.mxu0 %v425
        %449 = vmatprep.subr.bf16.mxu0 0
        %450 = vmatpush1.bf16.msra.mxu0 %v426
        %451 = vmatprep.subr.bf16.mxu0 0
        %452 = vmatpush1.bf16.msra.mxu0 0
        %453 = vmatprep.subr.bf16.mxu0 0
        %454 = vmatpush1.bf16.msra.mxu0 0
        %455 = vmatprep.subr.bf16.mxu0 0
        %456 = vmatpush1.bf16.msra.mxu0 0
        %457 = vmatprep.subr.bf16.mxu0 0
        %458 = vmatpush1.bf16.msra.mxu0 0
        %459 = vmatprep.subr.bf16.mxu0 0
        %460 = vmatpush1.bf16.msra.mxu0 0
        %461 = vmatprep.subr.bf16.mxu0 0
        %462 = vmatpush1.bf16.msra.mxu0 0
        %463 = vmatprep.subr.bf16.mxu0 0
        %464 = vmatpush1.bf16.msra.mxu0 0
        %465 = vmatprep.subr.bf16.mxu0 0
        %466 = vmatpush1.bf16.msra.mxu0 0
        %467 = vmatprep.mubr.bf16.mxu0 0
        %468 = vmatmul.mubr.bf16.gmra.mrb[0].mxu0 %v369
        %v469 = vpop.f32.mrb[0].mxu0
        %v470 = vadd.f32 0.0, %v469
        %v471 = vpop.f32.mrb[0].mxu0
        %v472 = vpop.f32.mrb[0].mxu0
        %v473 = vpop.f32.mrb[0].mxu0
        %474 = vdwg.mxu0
        %v475 = vadd.f32 %v386, %v470
        %476 = vst [vmem:[#allocation2] sm:$0xff] %v475
        // Predicated region
        $region69: #{tpu_custom_call.1} parent=47 // pred_check
          %p477 = pneg %p363
        $region70: #{tpu_custom_call.1} parent=47 // pred_check_branch
          %479 = sbr.rel (%p477) target = $region72
        $region71: #{tpu_custom_call.1} parent=47 // pred_region
          %v480 = vld [vmem:[#allocation2] sm:$0xff]
          %v481 = vld [vmem:[%s2] sm:$0x1]
          %v483 = vlaneseq
          %v484 = vshrl.u32 %v483, 7
          %v485 = vsub.s32 0, %v484
          %v486 = vrot.slane %v481, %v485
          %v488 = vadd.f32 %v480, %v486
          %vm489 = vcmp.ge.f32.partialorder %v488, 0.0
          %v490 = vmul.f32 %v488, 0.01
          %v491 = vsel %vm489, %v488, %v490
          %v492 = vld [vmem:[#allocation8] sm:$0xf]
          %v493 = vld [vmem:[#allocation8 + $0x4] sm:$0xf]
          %v494 = vld [vmem:[#allocation8 + $0x8] sm:$0xf]
          %v495 = vld [vmem:[#allocation8 + $0xc] sm:$0xf]
          %v496 = vld [vmem:[#allocation8 + $0x10] sm:$0xf]
          %v497 = vld [vmem:[#allocation8 + $0x14] sm:$0xf]
          %v498 = vld [vmem:[#allocation8 + $0x18] sm:$0xf]
          %v499 = vld [vmem:[#allocation8 + $0x1c] sm:$0xf]
          %v500 = vld [vmem:[#allocation8 + $0x20] sm:$0xf]
          %v501 = vld [vmem:[#allocation8 + $0x24] sm:$0xf]
          %v502 = vld [vmem:[#allocation8 + $0x28] sm:$0xf]
          %v503 = vld [vmem:[#allocation8 + $0x2c] sm:$0xf]
          %v504 = vld [vmem:[#allocation8 + $0x30] sm:$0xf]
          %v505 = vld [vmem:[#allocation8 + $0x34] sm:$0xf]
          %v506 = vld [vmem:[#allocation8 + $0x38] sm:$0xf]
          %v507 = vld [vmem:[#allocation8 + $0x3c] sm:$0xf]
          %v508 = vld [vmem:[%s4] sm:$0x1]
          %v509 = vpack.c.bf16 %v491, %v491
          %v511 = vlaneseq
          %v512 = vshrl.u32 %v511, 7
          %v513 = vsub.s32 0, %v512
          %v514 = vrot.slane %v508, %v513
          %v532 = vunpack.c.l.b16 %v492
          %v533 = vunpack.c.l.b16 %v493
          %v534 = vunpack.c.l.b16 %v494
          %v535 = vunpack.c.l.b16 %v495
          %v536 = vunpack.c.l.b16 %v496
          %v537 = vunpack.c.l.b16 %v497
          %v538 = vunpack.c.l.b16 %v498
          %v539 = vunpack.c.l.b16 %v499
          %v540 = vunpack.c.l.b16 %v500
          %v541 = vunpack.c.l.b16 %v501
          %v542 = vunpack.c.l.b16 %v502
          %v543 = vunpack.c.l.b16 %v503
          %v544 = vunpack.c.l.b16 %v504
          %v545 = vunpack.c.l.b16 %v505
          %v546 = vunpack.c.l.b16 %v506
          %v547 = vunpack.c.l.b16 %v507
          %v548 = vpack.c.b16 %v533, %v532
          %v549 = vpack.c.b16 %v535, %v534
          %v550 = vpack.c.b16 %v537, %v536
          %v551 = vpack.c.b16 %v539, %v538
          %v552 = vpack.c.b16 %v541, %v540
          %v553 = vpack.c.b16 %v543, %v542
          %v554 = vpack.c.b16 %v545, %v544
          %v555 = vpack.c.b16 %v547, %v546
          %564 = vmatprep.subr.bf16.mxu0 0
          %565 = vmatpush1.bf16.msra.mxu0 %v548
          %566 = vmatprep.subr.bf16.mxu0 0
          %567 = vmatpush1.bf16.msra.mxu0 %v549
          %568 = vmatprep.subr.bf16.mxu0 0
          %569 = vmatpush1.bf16.msra.mxu0 %v550
          %570 = vmatprep.subr.bf16.mxu0 0
          %571 = vmatpush1.bf16.msra.mxu0 %v551
          %572 = vmatprep.subr.bf16.mxu0 0
          %573 = vmatpush1.bf16.msra.mxu0 %v552
          %574 = vmatprep.subr.bf16.mxu0 0
          %575 = vmatpush1.bf16.msra.mxu0 %v553
          %576 = vmatprep.subr.bf16.mxu0 0
          %577 = vmatpush1.bf16.msra.mxu0 %v554
          %578 = vmatprep.subr.bf16.mxu0 0
          %579 = vmatpush1.bf16.msra.mxu0 %v555
          %580 = vmatprep.subr.bf16.mxu0 0
          %581 = vmatpush1.bf16.msra.mxu0 0
          %582 = vmatprep.subr.bf16.mxu0 0
          %583 = vmatpush1.bf16.msra.mxu0 0
          %584 = vmatprep.subr.bf16.mxu0 0
          %585 = vmatpush1.bf16.msra.mxu0 0
          %586 = vmatprep.subr.bf16.mxu0 0
          %587 = vmatpush1.bf16.msra.mxu0 0
          %588 = vmatprep.subr.bf16.mxu0 0
          %589 = vmatpush1.bf16.msra.mxu0 0
          %590 = vmatprep.subr.bf16.mxu0 0
          %591 = vmatpush1.bf16.msra.mxu0 0
          %592 = vmatprep.subr.bf16.mxu0 0
          %593 = vmatpush1.bf16.msra.mxu0 0
          %594 = vmatprep.subr.bf16.mxu0 0
          %595 = vmatpush1.bf16.msra.mxu0 0
          %596 = vmatprep.mubr.bf16.mxu0 0
          %597 = vmatmul.mubr.bf16.gmra.mrb[0].mxu0 %v509
          %v598 = vpop.f32.mrb[0].mxu0
          %v599 = vadd.f32 %v514, %v598
          %v600 = vpop.f32.mrb[0].mxu0
          %v601 = vpop.f32.mrb[0].mxu0
          %v602 = vpop.f32.mrb[0].mxu0
          %603 = vdwg.mxu0
          %vm604 = vcmp.ge.f32.partialorder %v599, 0.0
          %v605 = vmul.f32 %v599, 0.01
          %v606 = vsel %vm604, %v599, %v605
          %v607 = vld [vmem:[#allocation9] sm:$0xf]
          %v608 = vld [vmem:[#allocation9 + $0x4] sm:$0xf]
          %v609 = vld [vmem:[#allocation9 + $0x8] sm:$0xf]
          %v610 = vld [vmem:[#allocation9 + $0xc] sm:$0xf]
          %v611 = vld [vmem:[#allocation9 + $0x10] sm:$0xf]
          %v612 = vld [vmem:[#allocation9 + $0x14] sm:$0xf]
          %v613 = vld [vmem:[#allocation9 + $0x18] sm:$0xf]
          %v614 = vld [vmem:[#allocation9 + $0x1c] sm:$0xf]
          %v615 = vld [vmem:[#allocation9 + $0x20] sm:$0xf]
          %v616 = vld [vmem:[#allocation9 + $0x24] sm:$0xf]
          %v617 = vld [vmem:[#allocation9 + $0x28] sm:$0xf]
          %v618 = vld [vmem:[#allocation9 + $0x2c] sm:$0xf]
          %v619 = vld [vmem:[#allocation9 + $0x30] sm:$0xf]
          %v620 = vld [vmem:[#allocation9 + $0x34] sm:$0xf]
          %v621 = vld [vmem:[#allocation9 + $0x38] sm:$0xf]
          %v622 = vld [vmem:[#allocation9 + $0x3c] sm:$0xf]
          %v623 = vld [vmem:[%s6] sm:$0x1]
          %v624 = vpack.c.bf16 %v606, %v606
          %v626 = vlaneseq
          %v627 = vshrl.u32 %v626, 7
          %v628 = vsub.s32 0, %v627
          %v629 = vrot.slane %v623, %v628
          %v647 = vunpack.c.l.b16 %v607
          %v648 = vunpack.c.l.b16 %v608
          %v649 = vunpack.c.l.b16 %v609
          %v650 = vunpack.c.l.b16 %v610
          %v651 = vunpack.c.l.b16 %v611
          %v652 = vunpack.c.l.b16 %v612
          %v653 = vunpack.c.l.b16 %v613
          %v654 = vunpack.c.l.b16 %v614
          %v655 = vunpack.c.l.b16 %v615
          %v656 = vunpack.c.l.b16 %v616
          %v657 = vunpack.c.l.b16 %v617
          %v658 = vunpack.c.l.b16 %v618
          %v659 = vunpack.c.l.b16 %v619
          %v660 = vunpack.c.l.b16 %v620
          %v661 = vunpack.c.l.b16 %v621
          %v662 = vunpack.c.l.b16 %v622
          %v663 = vpack.c.b16 %v648, %v647
          %v664 = vpack.c.b16 %v650, %v649
          %v665 = vpack.c.b16 %v652, %v651
          %v666 = vpack.c.b16 %v654, %v653
          %v667 = vpack.c.b16 %v656, %v655
          %v668 = vpack.c.b16 %v658, %v657
          %v669 = vpack.c.b16 %v660, %v659
          %v670 = vpack.c.b16 %v662, %v661
          %679 = vmatprep.subr.bf16.mxu0 0
          %680 = vmatpush1.bf16.msra.mxu0 %v663
          %681 = vmatprep.subr.bf16.mxu0 0
          %682 = vmatpush1.bf16.msra.mxu0 %v664
          %683 = vmatprep.subr.bf16.mxu0 0
          %684 = vmatpush1.bf16.msra.mxu0 %v665
          %685 = vmatprep.subr.bf16.mxu0 0
          %686 = vmatpush1.bf16.msra.mxu0 %v666
          %687 = vmatprep.subr.bf16.mxu0 0
          %688 = vmatpush1.bf16.msra.mxu0 %v667
          %689 = vmatprep.subr.bf16.mxu0 0
          %690 = vmatpush1.bf16.msra.mxu0 %v668
          %691 = vmatprep.subr.bf16.mxu0 0
          %692 = vmatpush1.bf16.msra.mxu0 %v669
          %693 = vmatprep.subr.bf16.mxu0 0
          %694 = vmatpush1.bf16.msra.mxu0 %v670
          %695 = vmatprep.subr.bf16.mxu0 0
          %696 = vmatpush1.bf16.msra.mxu0 0
          %697 = vmatprep.subr.bf16.mxu0 0
          %698 = vmatpush1.bf16.msra.mxu0 0
          %699 = vmatprep.subr.bf16.mxu0 0
          %700 = vmatpush1.bf16.msra.mxu0 0
          %701 = vmatprep.subr.bf16.mxu0 0
          %702 = vmatpush1.bf16.msra.mxu0 0
          %703 = vmatprep.subr.bf16.mxu0 0
          %704 = vmatpush1.bf16.msra.mxu0 0
          %705 = vmatprep.subr.bf16.mxu0 0
          %706 = vmatpush1.bf16.msra.mxu0 0
          %707 = vmatprep.subr.bf16.mxu0 0
          %708 = vmatpush1.bf16.msra.mxu0 0
          %709 = vmatprep.subr.bf16.mxu0 0
          %710 = vmatpush1.bf16.msra.mxu0 0
          %711 = vmatprep.mubr.bf16.mxu0 0
          %712 = vmatmul.mubr.bf16.gmra.mrb[0].mxu0 %v624
          %v713 = vpop.f32.mrb[0].mxu0
          %v714 = vadd.f32 %v629, %v713
          %v715 = vpop.f32.mrb[0].mxu0
          %v716 = vpop.f32.mrb[0].mxu0
          %v717 = vpop.f32.mrb[0].mxu0
          %718 = vdwg.mxu0
          %v719 = vsub.f32 0.0, %v714
          %v720 = vmul.f32 %v719, 1.442695
          %v721 = vpow.pop %v720
          %v722 = vadd.f32 %v721, 1.0
          %v723 = vrcp.pop %v722
          %724 = vst [vmem:[%s360] sm:$0xff] %v723
        $region72: #{tpu_custom_call.1} parent=47 // pred_fallthru
          _
        %s725 = sand.u32 %s205, 1
        %s726 = scalar_lea.sflag [#allocation5], %s725
        %s727 = sand.u32 %s205, 1
        %s728 = smul.addr %s727, 8
        %s729 = scalar_lea.vmem [#allocation11], %s728
        // Predicated region
        $region73: #{tpu_custom_call.1} parent=47 // pred_check
          %p730 = pneg %p215
        $region74: #{tpu_custom_call.1} parent=47 // pred_check_branch
          %732 = sbr.rel (%p730) target = $region76
        $region75: #{tpu_custom_call.1} parent=47 // pred_region
          %s734 = ssub.s32 128, 128
          %735 = vsyncadd %s726, %s734
          %s736 = smul.addr %s30, 128
          %s737 = scalar_lea.hbm %s7, %s736
          %s739 = sshll.u32 %s729, 4
          %s740 = int_to_ptr.vmem [resolvable:$true] %s739
          %742 = dma.vmem_to_hbm [thread:$0]  %s740, 128, %s737, %s726
        $region76: #{tpu_custom_call.1} parent=47 // pred_fallthru
          _
      $region48: #{tpu_custom_call.1} parent=5 // pred_fallthru
        _
      %p743 = scmp.le.s32.totalorder 2, %s21
      // Predicated region
      $region77: #{tpu_custom_call.1} parent=5 // pred_check
        %p744 = pneg %p743
      $region78: #{tpu_custom_call.1} parent=5 // pred_check_branch
        %746 = sbr.rel (%p744) target = $region80
      $region79: #{tpu_custom_call.1} parent=5 // pred_region
        %s747 = ssub.s32 %s21, 2
        // Predicated region
        $region81: #{tpu_custom_call.1} parent=79 // pred_check
          %p748 = pneg %p221
        $region82: #{tpu_custom_call.1} parent=79 // pred_check_branch
          %750 = sbr.rel (%p748) target = $region84
        $region83: #{tpu_custom_call.1} parent=79 // pred_region
          %s751 = sand.u32 %s206, 1
          %s752 = scalar_lea.sflag [#allocation5], %s751
          %s753 = sand.u32 %s206, 1
          %s754 = smul.addr %s753, 8
          %s755 = scalar_lea.vmem [#allocation11], %s754
          %756 = dma.done %s752, 128
        $region84: #{tpu_custom_call.1} parent=79 // pred_fallthru
          _
      $region80: #{tpu_custom_call.1} parent=5 // pred_fallthru
        _
    $region6: #{tpu_custom_call.1} parent=1 // loop_footer
      %s25 = sadd.s32 1, %s21
    $region7: #{tpu_custom_call.1} parent=1 // loop_footer_branch
      %20 = sbr.rel target = $region3
    $region8: #{tpu_custom_call.1} parent=1 // loop_exit
      _
    %757 = vsyncpa [#allocation4], 1
    %s758 = scalar_lea.sflag [#allocation4], 1
    %759 = vsyncpa %s758, 1
    %760 = vsyncpa [#allocation7], 1
    %761 = vsyncpa [#allocation10], 1
    %762 = vsyncpa [#allocation5], 1
    %s763 = scalar_lea.sflag [#allocation5], 1
    %764 = vsyncpa %s763, 1

</llo_original>
